<compile_context>
chip_gen: v5e
topology: v5e:2x2
jax: 0.10.0
libtpu: 0.0.40
codegen_flags: <defaults>
</compile_context>

<pallas_src>
import functools

import jax
import jax.numpy as jnp
from jax.experimental import pallas as pl
from jax.experimental.pallas import tpu as pltpu


def _tap_ds(start, size, stride):
    # pl.ds with optional stride (plain contiguous slice for stride == 1).
    return pl.ds(start, size) if stride == 1 else pl.ds(start, size, stride)


# ---------------------------------------------------------------------------
# Pallas kernel: fused zero-pad conv (direct, im2col-free) + bias + ReLU
# ---------------------------------------------------------------------------
def _conv_kernel(x_ref, w_ref, b_ref, o_ref, *, k, stride, dilation,
                 h_out, w_out):
    """Direct convolution for one image.

    x_ref: (1, Hp, Wp, C)        zero-padded NHWC image (compute dtype)
    w_ref: (k*k, O, C)           weight-normed taps (compute dtype)
    b_ref: (O, 1)                bias (f32)
    o_ref: (1, O, H_out*W_out)   output (f32), lane-dense NCHW slab
    """
    n_out = o_ref.shape[1]
    m = h_out * w_out
    acc = jnp.zeros((n_out, m), dtype=jnp.float32)

    for kh in range(k):
        for kw in range(k):
            h0 = kh * dilation
            w0 = kw * dilation
            # (h_out, w_out, C) shifted (and possibly strided) window.
            xs = x_ref[0, _tap_ds(h0, h_out, stride),
                          _tap_ds(w0, w_out, stride), :]
            xs = xs.reshape(m, xs.shape[-1])        # (M, C): lane dim (C) kept
            w_t = w_ref[kh * k + kw]                # (O, C)
            # acc[o, m] += sum_c w[o, c] * xs[m, c]  (contract last dims, f32 acc)
            acc = acc + jax.lax.dot_general(
                w_t, xs,
                dimension_numbers=(((1,), (1,)), ((), ())),
                preferred_element_type=jnp.float32)

    acc = acc + b_ref[...]                          # (O, 1) lane-broadcast bias
    o_ref[0] = jnp.maximum(acc, 0.0).astype(o_ref.dtype)


# ---------------------------------------------------------------------------
# Conv2dBlock forward (weight norm + zero pad + conv + bias + ReLU)
# ---------------------------------------------------------------------------
@functools.partial(jax.jit, static_argnames=("kernel_size", "stride", "padding",
                                             "dilation", "compute_dtype"))
def conv2d_block_forward(x, v, g, bias, *, kernel_size, stride, padding,
                         dilation, compute_dtype=jnp.bfloat16):
    """x: (N, C_in, H, W) NCHW; v: (O, C_in, k, k); g: (O,); bias: (O,)."""
    N, C, H, W = x.shape
    O = v.shape[0]
    k = kernel_size

    # weight_norm: w[o] = g[o] * v[o] / ||v[o]||_F (norm over dims 1,2,3), in f32.
    v32 = v.astype(jnp.float32)
    v_norm = jnp.sqrt(jnp.sum(v32 ** 2, axis=(1, 2, 3), keepdims=True))
    w_eff = g.astype(jnp.float32).reshape(O, 1, 1, 1) * v32 / v_norm  # (O,C,k,k)
    # Tap-major layout (k*k, O, C) so the kernel grabs an (O, C) slice per tap.
    w_taps = w_eff.transpose(2, 3, 0, 1).reshape(k * k, O, C).astype(compute_dtype)

    # ZeroPad2d + NCHW->NHWC so the contraction axis (C) is the lane axis.
    # TODO(synk): accept NHWC activations end-to-end to drop this input transpose.
    xp = jnp.pad(x, ((0, 0), (0, 0), (padding, padding), (padding, padding)))
    Hp, Wp = H + 2 * padding, W + 2 * padding
    x_nhwc = xp.transpose(0, 2, 3, 1).astype(compute_dtype)  # (N, Hp, Wp, C)

    H_out = (Hp - dilation * (k - 1) - 1) // stride + 1
    W_out = (Wp - dilation * (k - 1) - 1) // stride + 1
    M = H_out * W_out

    b2 = bias.astype(jnp.float32).reshape(O, 1)

    kernel = functools.partial(_conv_kernel, k=k, stride=stride,
                               dilation=dilation, h_out=H_out, w_out=W_out)

    # Explicit VMEM budget: double-buffered input/output blocks + resident
    # weights + slack, clamped well inside v7x's 64 MiB physical VMEM.
    isz = jnp.dtype(compute_dtype).itemsize
    in_block = Hp * Wp * C * isz
    out_block = O * M * 4
    w_bytes = k * k * O * C * isz + O * 4
    need = 2 * (in_block + out_block) + 2 * w_bytes
    vmem_limit = int(min(max(4 * need + (1 << 20), 4 << 20), 48 << 20))

    cost = pl.CostEstimate(
        flops=2 * N * M * C * k * k * O,
        transcendentals=0,
        bytes_accessed=int(N * in_block + N * out_block + w_bytes),
    )

    out = pl.pallas_call(
        kernel,
        out_shape=jax.ShapeDtypeStruct((N, O, M), jnp.float32),
        grid_spec=pltpu.PrefetchScalarGridSpec(
            num_scalar_prefetch=0,
            # One padded image per grid step; N>=2 keeps both v7x TCs busy.
            # TODO(synk): for large images / C_out>=128, add H_out row-band and
            # output-channel grid axes (256-wide MXU tiles on v6e/v7x).
            grid=(N,),
            in_specs=[
                pl.BlockSpec((1, Hp, Wp, C), lambda n: (n, 0, 0, 0)),
                pl.BlockSpec((k * k, O, C), lambda n: (0, 0, 0)),
                pl.BlockSpec((O, 1), lambda n: (0, 0)),
            ],
            out_specs=pl.BlockSpec((1, O, M), lambda n: (n, 0, 0)),
        ),
        compiler_params=pltpu.CompilerParams(
            dimension_semantics=("parallel",),
            vmem_limit_bytes=vmem_limit,
        ),
        cost_estimate=cost,
    )(x_nhwc, w_taps, b2)

    # Metadata-only reshape to NCHW (N, O, H_out, W_out); no transpose needed.
    return out.reshape(N, O, H_out, W_out)


# ---------------------------------------------------------------------------
# Pure-JAX f32 reference for verification
# ---------------------------------------------------------------------------
def _reference(x, v, g, bias, *, kernel_size, stride, padding, dilation):
    O = v.shape[0]
    v_norm = jnp.sqrt(jnp.sum(v ** 2, axis=(1, 2, 3), keepdims=True))
    w = g.reshape(O, 1, 1, 1) * v / v_norm
    xp = jnp.pad(x, ((0, 0), (0, 0), (padding, padding), (padding, padding)))
    y = jax.lax.conv_general_dilated(
        xp, w, window_strides=(stride, stride), padding="VALID",
        rhs_dilation=(dilation, dilation),
        dimension_numbers=("NCHW", "OIHW", "NCHW"))
    y = y + bias.reshape(1, O, 1, 1)
    return jnp.maximum(y, 0.0)


if __name__ == "__main__":
    # Small shapes consistent with the module: batch=2, C_in=4, spatial=16,
    # C_out=8, kernel=3, stride=1, padding=1, dilation=1.
    N, C_in, H, W = 2, 4, 16, 16
    C_out, k, stride, padding, dilation = 8, 3, 1, 1, 1

    key = jax.random.PRNGKey(0)
    kx, kv, kg, kb = jax.random.split(key, 4)
    x = jax.random.normal(kx, (N, C_in, H, W), dtype=jnp.float32)
    v = jax.random.normal(kv, (C_out, C_in, k, k), dtype=jnp.float32) * 0.1
    g = jax.random.normal(kg, (C_out,), dtype=jnp.float32) * 0.5 + 1.0
    bias = jax.random.normal(kb, (C_out,), dtype=jnp.float32) * 0.1

    out = conv2d_block_forward(x, v, g, bias, kernel_size=k, stride=stride,
                               padding=padding, dilation=dilation)
    out = jax.block_until_ready(out)

    ref = _reference(x, v, g, bias, kernel_size=k, stride=stride,
                     padding=padding, dilation=dilation)
    ref = jax.block_until_ready(ref)

    assert out.shape == (N, C_out, H, W), out.shape
    # bf16 MXU operands, f32 accumulation -> relaxed tolerance vs f32 reference.
    assert jnp.allclose(out, ref, atol=2e-2, rtol=2e-2), \
        float(jnp.max(jnp.abs(out - ref)))
    print("KERNEL_OK")
</pallas_src>

<mosaic_0001>
module attributes {stable_mosaic.version = 11 : i64} {
  func.func @_conv_kernel(%arg0: i32, %arg1: memref<1x18x18x4xbf16, #tpu.memory_space<vmem>>, %arg2: memref<9x8x4xbf16, #tpu.memory_space<vmem>>, %arg3: memref<8x1xf32, #tpu.memory_space<vmem>>, %arg4: memref<1x8x256xf32, #tpu.memory_space<vmem>>) attributes {dimension_semantics = [#tpu.dimension_semantics<parallel>], iteration_bounds = array<i64: 2>, scalar_prefetch = 0 : i64, scratch_operands = 0 : i64, tpu.core_type = #tpu.core_type<tc>, window_params = [{transform_indices = @transform_0, window_bounds = array<i64: 1, 18, 18, 4>}, {pipeline_mode = #tpu.pipeline_mode<synchronous>, transform_indices = @transform_1, window_bounds = array<i64: 9, 8, 4>}, {pipeline_mode = #tpu.pipeline_mode<synchronous>, transform_indices = @transform_2, window_bounds = array<i64: 8, 1>}, {transform_indices = @transform_3, window_bounds = array<i64: 1, 8, 256>}]} {
    %cst = arith.constant 0.000000e+00 : f32
    %0 = vector.broadcast %cst : f32 to vector<8x256xf32>
    %c0 = arith.constant 0 : index
    %c0_0 = arith.constant 0 : index
    %c0_1 = arith.constant 0 : index
    %c0_2 = arith.constant 0 : index
    %1 = vector.load %arg1[%c0, %c0_0, %c0_1, %c0_2] : memref<1x18x18x4xbf16, #tpu.memory_space<vmem>>, vector<1x16x16x4xbf16>
    %2 = vector.shape_cast %1 : vector<1x16x16x4xbf16> to vector<16x16x4xbf16>
    %3 = vector.shape_cast %2 : vector<16x16x4xbf16> to vector<256x4xbf16>
    %c0_3 = arith.constant 0 : index
    %c0_4 = arith.constant 0 : index
    %c0_5 = arith.constant 0 : index
    %4 = vector.load %arg2[%c0_3, %c0_4, %c0_5] : memref<9x8x4xbf16, #tpu.memory_space<vmem>>, vector<1x8x4xbf16>
    %5 = vector.shape_cast %4 : vector<1x8x4xbf16> to vector<8x4xbf16>
    %cst_6 = arith.constant dense<0.000000e+00> : vector<8x256xf32>
    %6 = tpu.matmul %5, %3, %cst_6 {dimension_numbers = #tpu.dot_dimension_numbers<[1], [1], [0], [0], [0, 0, 1, 0], [], []>} : vector<8x4xbf16>, vector<256x4xbf16>, vector<8x256xf32> -> vector<8x256xf32>
    %7 = arith.addf %0, %6 : vector<8x256xf32>
    %c0_7 = arith.constant 0 : index
    %c0_8 = arith.constant 0 : index
    %c1 = arith.constant 1 : index
    %c0_9 = arith.constant 0 : index
    %8 = vector.load %arg1[%c0_7, %c0_8, %c1, %c0_9] : memref<1x18x18x4xbf16, #tpu.memory_space<vmem>>, vector<1x16x16x4xbf16>
    %9 = vector.shape_cast %8 : vector<1x16x16x4xbf16> to vector<16x16x4xbf16>
    %10 = vector.shape_cast %9 : vector<16x16x4xbf16> to vector<256x4xbf16>
    %c1_10 = arith.constant 1 : index
    %c0_11 = arith.constant 0 : index
    %c0_12 = arith.constant 0 : index
    %11 = vector.load %arg2[%c1_10, %c0_11, %c0_12] : memref<9x8x4xbf16, #tpu.memory_space<vmem>>, vector<1x8x4xbf16>
    %12 = vector.shape_cast %11 : vector<1x8x4xbf16> to vector<8x4xbf16>
    %cst_13 = arith.constant dense<0.000000e+00> : vector<8x256xf32>
    %13 = tpu.matmul %12, %10, %cst_13 {dimension_numbers = #tpu.dot_dimension_numbers<[1], [1], [0], [0], [0, 0, 1, 0], [], []>} : vector<8x4xbf16>, vector<256x4xbf16>, vector<8x256xf32> -> vector<8x256xf32>
    %14 = arith.addf %7, %13 : vector<8x256xf32>
    %c0_14 = arith.constant 0 : index
    %c0_15 = arith.constant 0 : index
    %c2 = arith.constant 2 : index
    %c0_16 = arith.constant 0 : index
    %15 = vector.load %arg1[%c0_14, %c0_15, %c2, %c0_16] : memref<1x18x18x4xbf16, #tpu.memory_space<vmem>>, vector<1x16x16x4xbf16>
    %16 = vector.shape_cast %15 : vector<1x16x16x4xbf16> to vector<16x16x4xbf16>
    %17 = vector.shape_cast %16 : vector<16x16x4xbf16> to vector<256x4xbf16>
    %c2_17 = arith.constant 2 : index
    %c0_18 = arith.constant 0 : index
    %c0_19 = arith.constant 0 : index
    %18 = vector.load %arg2[%c2_17, %c0_18, %c0_19] : memref<9x8x4xbf16, #tpu.memory_space<vmem>>, vector<1x8x4xbf16>
    %19 = vector.shape_cast %18 : vector<1x8x4xbf16> to vector<8x4xbf16>
    %cst_20 = arith.constant dense<0.000000e+00> : vector<8x256xf32>
    %20 = tpu.matmul %19, %17, %cst_20 {dimension_numbers = #tpu.dot_dimension_numbers<[1], [1], [0], [0], [0, 0, 1, 0], [], []>} : vector<8x4xbf16>, vector<256x4xbf16>, vector<8x256xf32> -> vector<8x256xf32>
    %21 = arith.addf %14, %20 : vector<8x256xf32>
    %c0_21 = arith.constant 0 : index
    %c1_22 = arith.constant 1 : index
    %c0_23 = arith.constant 0 : index
    %c0_24 = arith.constant 0 : index
    %22 = vector.load %arg1[%c0_21, %c1_22, %c0_23, %c0_24] : memref<1x18x18x4xbf16, #tpu.memory_space<vmem>>, vector<1x16x16x4xbf16>
    %23 = vector.shape_cast %22 : vector<1x16x16x4xbf16> to vector<16x16x4xbf16>
    %24 = vector.shape_cast %23 : vector<16x16x4xbf16> to vector<256x4xbf16>
    %c3 = arith.constant 3 : index
    %c0_25 = arith.constant 0 : index
    %c0_26 = arith.constant 0 : index
    %25 = vector.load %arg2[%c3, %c0_25, %c0_26] : memref<9x8x4xbf16, #tpu.memory_space<vmem>>, vector<1x8x4xbf16>
    %26 = vector.shape_cast %25 : vector<1x8x4xbf16> to vector<8x4xbf16>
    %cst_27 = arith.constant dense<0.000000e+00> : vector<8x256xf32>
    %27 = tpu.matmul %26, %24, %cst_27 {dimension_numbers = #tpu.dot_dimension_numbers<[1], [1], [0], [0], [0, 0, 1, 0], [], []>} : vector<8x4xbf16>, vector<256x4xbf16>, vector<8x256xf32> -> vector<8x256xf32>
    %28 = arith.addf %21, %27 : vector<8x256xf32>
    %c0_28 = arith.constant 0 : index
    %c1_29 = arith.constant 1 : index
    %c1_30 = arith.constant 1 : index
    %c0_31 = arith.constant 0 : index
    %29 = vector.load %arg1[%c0_28, %c1_29, %c1_30, %c0_31] : memref<1x18x18x4xbf16, #tpu.memory_space<vmem>>, vector<1x16x16x4xbf16>
    %30 = vector.shape_cast %29 : vector<1x16x16x4xbf16> to vector<16x16x4xbf16>
    %31 = vector.shape_cast %30 : vector<16x16x4xbf16> to vector<256x4xbf16>
    %c4 = arith.constant 4 : index
    %c0_32 = arith.constant 0 : index
    %c0_33 = arith.constant 0 : index
    %32 = vector.load %arg2[%c4, %c0_32, %c0_33] : memref<9x8x4xbf16, #tpu.memory_space<vmem>>, vector<1x8x4xbf16>
    %33 = vector.shape_cast %32 : vector<1x8x4xbf16> to vector<8x4xbf16>
    %cst_34 = arith.constant dense<0.000000e+00> : vector<8x256xf32>
    %34 = tpu.matmul %33, %31, %cst_34 {dimension_numbers = #tpu.dot_dimension_numbers<[1], [1], [0], [0], [0, 0, 1, 0], [], []>} : vector<8x4xbf16>, vector<256x4xbf16>, vector<8x256xf32> -> vector<8x256xf32>
    %35 = arith.addf %28, %34 : vector<8x256xf32>
    %c0_35 = arith.constant 0 : index
    %c1_36 = arith.constant 1 : index
    %c2_37 = arith.constant 2 : index
    %c0_38 = arith.constant 0 : index
    %36 = vector.load %arg1[%c0_35, %c1_36, %c2_37, %c0_38] : memref<1x18x18x4xbf16, #tpu.memory_space<vmem>>, vector<1x16x16x4xbf16>
    %37 = vector.shape_cast %36 : vector<1x16x16x4xbf16> to vector<16x16x4xbf16>
    %38 = vector.shape_cast %37 : vector<16x16x4xbf16> to vector<256x4xbf16>
    %c5 = arith.constant 5 : index
    %c0_39 = arith.constant 0 : index
    %c0_40 = arith.constant 0 : index
    %39 = vector.load %arg2[%c5, %c0_39, %c0_40] : memref<9x8x4xbf16, #tpu.memory_space<vmem>>, vector<1x8x4xbf16>
    %40 = vector.shape_cast %39 : vector<1x8x4xbf16> to vector<8x4xbf16>
    %cst_41 = arith.constant dense<0.000000e+00> : vector<8x256xf32>
    %41 = tpu.matmul %40, %38, %cst_41 {dimension_numbers = #tpu.dot_dimension_numbers<[1], [1], [0], [0], [0, 0, 1, 0], [], []>} : vector<8x4xbf16>, vector<256x4xbf16>, vector<8x256xf32> -> vector<8x256xf32>
    %42 = arith.addf %35, %41 : vector<8x256xf32>
    %c0_42 = arith.constant 0 : index
    %c2_43 = arith.constant 2 : index
    %c0_44 = arith.constant 0 : index
    %c0_45 = arith.constant 0 : index
    %43 = vector.load %arg1[%c0_42, %c2_43, %c0_44, %c0_45] : memref<1x18x18x4xbf16, #tpu.memory_space<vmem>>, vector<1x16x16x4xbf16>
    %44 = vector.shape_cast %43 : vector<1x16x16x4xbf16> to vector<16x16x4xbf16>
    %45 = vector.shape_cast %44 : vector<16x16x4xbf16> to vector<256x4xbf16>
    %c6 = arith.constant 6 : index
    %c0_46 = arith.constant 0 : index
    %c0_47 = arith.constant 0 : index
    %46 = vector.load %arg2[%c6, %c0_46, %c0_47] : memref<9x8x4xbf16, #tpu.memory_space<vmem>>, vector<1x8x4xbf16>
    %47 = vector.shape_cast %46 : vector<1x8x4xbf16> to vector<8x4xbf16>
    %cst_48 = arith.constant dense<0.000000e+00> : vector<8x256xf32>
    %48 = tpu.matmul %47, %45, %cst_48 {dimension_numbers = #tpu.dot_dimension_numbers<[1], [1], [0], [0], [0, 0, 1, 0], [], []>} : vector<8x4xbf16>, vector<256x4xbf16>, vector<8x256xf32> -> vector<8x256xf32>
    %49 = arith.addf %42, %48 : vector<8x256xf32>
    %c0_49 = arith.constant 0 : index
    %c2_50 = arith.constant 2 : index
    %c1_51 = arith.constant 1 : index
    %c0_52 = arith.constant 0 : index
    %50 = vector.load %arg1[%c0_49, %c2_50, %c1_51, %c0_52] : memref<1x18x18x4xbf16, #tpu.memory_space<vmem>>, vector<1x16x16x4xbf16>
    %51 = vector.shape_cast %50 : vector<1x16x16x4xbf16> to vector<16x16x4xbf16>
    %52 = vector.shape_cast %51 : vector<16x16x4xbf16> to vector<256x4xbf16>
    %c7 = arith.constant 7 : index
    %c0_53 = arith.constant 0 : index
    %c0_54 = arith.constant 0 : index
    %53 = vector.load %arg2[%c7, %c0_53, %c0_54] : memref<9x8x4xbf16, #tpu.memory_space<vmem>>, vector<1x8x4xbf16>
    %54 = vector.shape_cast %53 : vector<1x8x4xbf16> to vector<8x4xbf16>
    %cst_55 = arith.constant dense<0.000000e+00> : vector<8x256xf32>
    %55 = tpu.matmul %54, %52, %cst_55 {dimension_numbers = #tpu.dot_dimension_numbers<[1], [1], [0], [0], [0, 0, 1, 0], [], []>} : vector<8x4xbf16>, vector<256x4xbf16>, vector<8x256xf32> -> vector<8x256xf32>
    %56 = arith.addf %49, %55 : vector<8x256xf32>
    %c0_56 = arith.constant 0 : index
    %c2_57 = arith.constant 2 : index
    %c2_58 = arith.constant 2 : index
    %c0_59 = arith.constant 0 : index
    %57 = vector.load %arg1[%c0_56, %c2_57, %c2_58, %c0_59] : memref<1x18x18x4xbf16, #tpu.memory_space<vmem>>, vector<1x16x16x4xbf16>
    %58 = vector.shape_cast %57 : vector<1x16x16x4xbf16> to vector<16x16x4xbf16>
    %59 = vector.shape_cast %58 : vector<16x16x4xbf16> to vector<256x4xbf16>
    %c8 = arith.constant 8 : index
    %c0_60 = arith.constant 0 : index
    %c0_61 = arith.constant 0 : index
    %60 = vector.load %arg2[%c8, %c0_60, %c0_61] : memref<9x8x4xbf16, #tpu.memory_space<vmem>>, vector<1x8x4xbf16>
    %61 = vector.shape_cast %60 : vector<1x8x4xbf16> to vector<8x4xbf16>
    %cst_62 = arith.constant dense<0.000000e+00> : vector<8x256xf32>
    %62 = tpu.matmul %61, %59, %cst_62 {dimension_numbers = #tpu.dot_dimension_numbers<[1], [1], [0], [0], [0, 0, 1, 0], [], []>} : vector<8x4xbf16>, vector<256x4xbf16>, vector<8x256xf32> -> vector<8x256xf32>
    %63 = arith.addf %56, %62 : vector<8x256xf32>
    %c0_63 = arith.constant 0 : index
    %c0_64 = arith.constant 0 : index
    %64 = vector.load %arg3[%c0_63, %c0_64] : memref<8x1xf32, #tpu.memory_space<vmem>>, vector<8x1xf32>
    %65 = vector.broadcast %64 : vector<8x1xf32> to vector<8x256xf32>
    %66 = arith.addf %63, %65 : vector<8x256xf32>
    %cst_65 = arith.constant 0.000000e+00 : f32
    %67 = vector.broadcast %cst_65 : f32 to vector<8x256xf32>
    %68 = arith.maximumf %66, %67 : vector<8x256xf32>
    %c0_66 = arith.constant 0 : index
    %c0_67 = arith.constant 0 : index
    %c0_68 = arith.constant 0 : index
    %69 = vector.load %arg4[%c0_66, %c0_67, %c0_68] : memref<1x8x256xf32, #tpu.memory_space<vmem>>, vector<1x8x256xf32>
    %70 = vector.shape_cast %69 : vector<1x8x256xf32> to vector<8x256xf32>
    %71 = vector.shape_cast %68 : vector<8x256xf32> to vector<1x8x256xf32>
    tpu.vector_store %arg4[%c0_66, %c0_67, %c0_68], %71 {strides = array<i32>} : memref<1x8x256xf32, #tpu.memory_space<vmem>>, vector<1x8x256xf32>,
    return
  }
  func.func @transform_0(%arg0: i32) -> (i32, i32, i32, i32) {
    %c0_i32 = arith.constant 0 : i32
    %c0_i32_0 = arith.constant 0 : i32
    %c0_i32_1 = arith.constant 0 : i32
    %c0_i32_2 = arith.constant 0 : i32
    return %arg0, %c0_i32, %c0_i32_0, %c0_i32_1 : i32, i32, i32, i32
  }
  func.func @transform_1(%arg0: i32) -> (i32, i32, i32) {
    %c0_i32 = arith.constant 0 : i32
    %c0_i32_0 = arith.constant 0 : i32
    %c0_i32_1 = arith.constant 0 : i32
    %c0_i32_2 = arith.constant 0 : i32
    return %c0_i32, %c0_i32_0, %c0_i32_1 : i32, i32, i32
  }
  func.func @transform_2(%arg0: i32) -> (i32, i32) {
    %c0_i32 = arith.constant 0 : i32
    %c0_i32_0 = arith.constant 0 : i32
    %c0_i32_1 = arith.constant 0 : i32
    return %c0_i32, %c0_i32_0 : i32, i32
  }
  func.func @transform_3(%arg0: i32) -> (i32, i32, i32) {
    %c0_i32 = arith.constant 0 : i32
    %c0_i32_0 = arith.constant 0 : i32
    %c0_i32_1 = arith.constant 0 : i32
    return %arg0, %c0_i32, %c0_i32_0 : i32, i32, i32
  }
}

</mosaic_0001>

<llo_original>
// kernel: conv2d_block_forward.1
$region0: #{conv2d_block_forward.1}
  #allocation0 [shape = 'u32[]', space=smem, size = 0x4, offset = 0x4, fixed_abs, tag = 'smem constant byte address 0x4 - core index']
  #allocation1 [shape = 'u32[72,128]{1,0:T(1,128)}', space=vmem, size = 0x9000, scoped, tag = 'internal scratch']
  %s0 = inlined_call_operand.vmem [shape: bf16[2,18,18,4], index: 0, kind: input, shape index: {}]
  %s1 = inlined_call_operand.vmem [shape: bf16[9,8,4], index: 1, kind: input, shape index: {}]
  %s2 = inlined_call_operand.vmem [shape: f32[8,1], index: 2, kind: input, shape index: {}]
  %s3 = inlined_call_operand.vmem [shape: f32[2,8,256], index: 3, kind: output, shape index: {}]
  %s4 = sld [smem:[#allocation0]]
  $region45: #{conv2d_block_forward.1} parent=0
    _
  %s6 = ssub.s32 1, %s4
  %s7 = scalar_select 0, %s6, %s4
  loop: start=0, step=1, limit=4
  $region2: #{conv2d_block_forward.1} parent=0 // loop_pre_header
    _
  $region3: #{conv2d_block_forward.1} parent=0 // loop_header
    %s9 = sphi 0, %s13
    %p10 = scmp.ge.s32.totalorder %s9, 4
    %s19 = sphi 0, %s21
    %s22 = sphi 0, %s19
    %s23 = sphi 0, %s22
    %s39 = sphi 0, %s23
    %s43 = sphi 0, %s43
    %s45 = sphi 0, %s43
    %s46 = sphi 0, %s45
    %s60 = sphi 0, %s46
    %s64 = sphi 0, %s64
    %s66 = sphi 0, %s64
    %s67 = sphi 0, %s66
    %s81 = sphi 0, %s67
    %s87 = sphi 0, %s89
    %s90 = sphi 0, %s87
    %s91 = sphi 0, %s90
    %s107 = sphi 0, %s91
  $region4: #{conv2d_block_forward.1} parent=0 // loop_header_branch
    %12 = sbr.rel (%p10) target = $region8
  $region5: #{conv2d_block_forward.1} parent=0 // loop_body
    %s14 = ssub.s32 %s9, 1
    %s15 = ssub.s32 %s9, 2
    %s16 = sadd.s32 %s9, 1
    %s17 = ssub.s32 %s9, %s16
    %p18 = scmp.eq.s32.totalorder %s17, 0
    %s20 = sadd.s32 %s19, 1
    %s21 = scalar_select %p18, %s19, %s20
    %p24 = pneg %p18
    %p25 = scmp.eq.s32.totalorder %s9, 1
    %p26 = por %p24, %p25
    %p27 = scmp.ne.s32.totalorder %s19, %s22
    %p28 = scmp.eq.s32.totalorder %s9, 0
    %p29 = por %p27, %p28
    %p30 = scmp.ne.s32.totalorder %s19, %s22
    %p31 = scmp.eq.s32.totalorder %s14, 1
    %p32 = por %p30, %p31
    %p33 = scmp.ne.s32.totalorder %s22, %s23
    %p34 = scmp.eq.s32.totalorder %s14, 0
    %p35 = por %p33, %p34
    %p36 = scmp.ne.s32.totalorder %s22, %s23
    %p37 = scmp.eq.s32.totalorder %s15, 1
    %p38 = por %p36, %p37
    %p40 = scmp.ne.s32.totalorder %s23, %s39
    %p41 = scmp.eq.s32.totalorder %s15, 0
    %p42 = por %p40, %p41
    %s44 = sadd.s32 %s43, 1
    %p47 = scmp.eq.s32.totalorder %s9, 1
    %p48 = scmp.ne.s32.totalorder %s43, %s45
    %p49 = scmp.eq.s32.totalorder %s9, 0
    %p50 = por %p48, %p49
    %p51 = scmp.ne.s32.totalorder %s43, %s45
    %p52 = scmp.eq.s32.totalorder %s14, 1
    %p53 = por %p51, %p52
    %p54 = scmp.ne.s32.totalorder %s45, %s46
    %p55 = scmp.eq.s32.totalorder %s14, 0
    %p56 = por %p54, %p55
    %p57 = scmp.ne.s32.totalorder %s45, %s46
    %p58 = scmp.eq.s32.totalorder %s15, 1
    %p59 = por %p57, %p58
    %p61 = scmp.ne.s32.totalorder %s46, %s60
    %p62 = scmp.eq.s32.totalorder %s15, 0
    %p63 = por %p61, %p62
    %s65 = sadd.s32 %s64, 1
    %p68 = scmp.eq.s32.totalorder %s9, 1
    %p69 = scmp.ne.s32.totalorder %s64, %s66
    %p70 = scmp.eq.s32.totalorder %s9, 0
    %p71 = por %p69, %p70
    %p72 = scmp.ne.s32.totalorder %s64, %s66
    %p73 = scmp.eq.s32.totalorder %s14, 1
    %p74 = por %p72, %p73
    %p75 = scmp.ne.s32.totalorder %s66, %s67
    %p76 = scmp.eq.s32.totalorder %s14, 0
    %p77 = por %p75, %p76
    %p78 = scmp.ne.s32.totalorder %s66, %s67
    %p79 = scmp.eq.s32.totalorder %s15, 1
    %p80 = por %p78, %p79
    %p82 = scmp.ne.s32.totalorder %s67, %s81
    %p83 = scmp.eq.s32.totalorder %s15, 0
    %p84 = por %p82, %p83
    %s85 = ssub.s32 %s9, %s16
    %p86 = scmp.eq.s32.totalorder %s85, 0
    %s88 = sadd.s32 %s87, 1
    %s89 = scalar_select %p86, %s87, %s88
    %p92 = pneg %p86
    %p93 = scmp.eq.s32.totalorder %s9, 1
    %p94 = por %p92, %p93
    %p95 = scmp.ne.s32.totalorder %s87, %s90
    %p96 = scmp.eq.s32.totalorder %s9, 0
    %p97 = por %p95, %p96
    %p98 = scmp.ne.s32.totalorder %s87, %s90
    %p99 = scmp.eq.s32.totalorder %s14, 1
    %p100 = por %p98, %p99
    %p101 = scmp.ne.s32.totalorder %s90, %s91
    %p102 = scmp.eq.s32.totalorder %s14, 0
    %p103 = por %p101, %p102
    %p104 = scmp.ne.s32.totalorder %s90, %s91
    %p105 = scmp.eq.s32.totalorder %s15, 1
    %p106 = por %p104, %p105
    %p108 = scmp.ne.s32.totalorder %s91, %s107
    %p109 = scmp.eq.s32.totalorder %s15, 0
    %p110 = por %p108, %p109
    %p111 = scmp.le.s32.totalorder 1, %s9
    %p112 = scmp.lt.s32.totalorder %s9, 3
    %p113 = pnand %p111, %p112
    %p114 = pneg %p113
    // Predicated region
    $region9: #{conv2d_block_forward.1} parent=5 // pred_check
      _
    $region10: #{conv2d_block_forward.1} parent=5 // pred_check_branch
      %116 = sbr.rel (%p113) target = $region12
    $region11: #{conv2d_block_forward.1} parent=5 // pred_region
      %s117 = ssub.s32 %s9, 1
      // Predicated region
      $region13: #{conv2d_block_forward.1} parent=11 // pred_check
        %p118 = pneg %p56
      $region14: #{conv2d_block_forward.1} parent=11 // pred_check_branch
        %120 = sbr.rel (%p118) target = $region16
      $region15: #{conv2d_block_forward.1} parent=11 // pred_region
        _
      $region16: #{conv2d_block_forward.1} parent=11 // pred_fallthru
        _
      // Predicated region
      $region17: #{conv2d_block_forward.1} parent=11 // pred_check
        %p121 = pneg %p77
      $region18: #{conv2d_block_forward.1} parent=11 // pred_check_branch
        %123 = sbr.rel (%p121) target = $region20
      $region19: #{conv2d_block_forward.1} parent=11 // pred_region
        _
      $region20: #{conv2d_block_forward.1} parent=11 // pred_fallthru
        _
    $region12: #{conv2d_block_forward.1} parent=5 // pred_fallthru
      _
    %p124 = scmp.lt.s32.totalorder %s9, 2
    // Predicated region
    $region21: #{conv2d_block_forward.1} parent=5 // pred_check
      %p125 = pneg %p124
    $region22: #{conv2d_block_forward.1} parent=5 // pred_check_branch
      %127 = sbr.rel (%p125) target = $region24
    $region23: #{conv2d_block_forward.1} parent=5 // pred_region
      // Predicated region
      $region25: #{conv2d_block_forward.1} parent=23 // pred_check
        %p128 = pneg %p29
      $region26: #{conv2d_block_forward.1} parent=23 // pred_check_branch
        %130 = sbr.rel (%p128) target = $region28
      $region27: #{conv2d_block_forward.1} parent=23 // pred_region
        %p131 = scmp.lt.s32.totalorder %s9, 1
        %s132 = scalar_select %p131, %s9, 1
        %s133 = smul.addr %s132, 54
        %s134 = smul.addr %s133, 4
        %s135 = scalar_lea.vmem %s0, %s134
      $region28: #{conv2d_block_forward.1} parent=23 // pred_fallthru
        _
    $region24: #{conv2d_block_forward.1} parent=5 // pred_fallthru
      _
    %p136 = scmp.le.s32.totalorder 1, %s9
    %p137 = scmp.lt.s32.totalorder %s9, 3
    %p138 = pnand %p136, %p137
    %p139 = pneg %p138
    // Predicated region
    $region29: #{conv2d_block_forward.1} parent=5 // pred_check
      _
    $region30: #{conv2d_block_forward.1} parent=5 // pred_check_branch
      %141 = sbr.rel (%p138) target = $region32
    $region31: #{conv2d_block_forward.1} parent=5 // pred_region
      %s142 = ssub.s32 %s9, 1
      %p143 = scmp.lt.s32.totalorder %s14, 1
      %s144 = scalar_select %p143, %s14, 1
      %s145 = smul.addr %s144, 54
      %s146 = smul.addr %s145, 4
      %s147 = scalar_lea.vmem %s0, %s146
      %p148 = pneg %p35
      %p149 = pneg %p32
      %p150 = pneg %p56
      %p151 = pneg %p53
      %p152 = pneg %p77
      %p153 = pneg %p74
      %p154 = pneg %p103
      %p155 = pneg %p100
      %p156 = scmp.lt.s32.totalorder %s14, 1
      %s157 = scalar_select %p156, %s14, 1
      %s158 = smul.addr %s157, 2
      %s159 = smul.addr %s158, 8
      %s160 = scalar_lea.vmem %s3, %s159
      %p161 = scmp.lt.s32.totalorder %s14, 1
      %s162 = scalar_select %p161, %s14, 1
      %s163 = smul.addr %s162, 54
      %s164 = smul.addr %s163, 4
      %s165 = scalar_lea.vmem %s0, %s164
      %p166 = scmp.lt.s32.totalorder %s14, 1
      %s167 = scalar_select %p166, %s14, 1
      %s168 = smul.addr %s167, 2
      %s169 = smul.addr %s168, 8
      %s170 = scalar_lea.vmem %s3, %s169
      %v171 = vld [vmem:[%s165] sm:$0xf]
      %v172 = vld [vmem:[%s165 + $0x4] sm:$0xf]
      %v173 = vld [vmem:[%s165 + $0xc] sm:$0xf]
      %v174 = vld [vmem:[%s165 + $0x10] sm:$0xf]
      %v175 = vld [vmem:[%s165 + $0x18] sm:$0xf]
      %v176 = vld [vmem:[%s165 + $0x1c] sm:$0xf]
      %v177 = vld [vmem:[%s165 + $0x24] sm:$0xf]
      %v178 = vld [vmem:[%s165 + $0x28] sm:$0xf]
      %v179 = vld [vmem:[%s165 + $0x30] sm:$0xf]
      %v180 = vld [vmem:[%s165 + $0x34] sm:$0xf]
      %v181 = vld [vmem:[%s165 + $0x3c] sm:$0xf]
      %v182 = vld [vmem:[%s165 + $0x40] sm:$0xf]
      %v183 = vld [vmem:[%s165 + $0x48] sm:$0xf]
      %v184 = vld [vmem:[%s165 + $0x4c] sm:$0xf]
      %v185 = vld [vmem:[%s165 + $0x54] sm:$0xf]
      %v186 = vld [vmem:[%s165 + $0x58] sm:$0xf]
      %v187 = vld [vmem:[%s165 + $0x60] sm:$0xf]
      %v188 = vld [vmem:[%s165 + $0x64] sm:$0xf]
      %v189 = vld [vmem:[%s165 + $0x6c] sm:$0xf]
      %v190 = vld [vmem:[%s165 + $0x70] sm:$0xf]
      %v191 = vld [vmem:[%s165 + $0x78] sm:$0xf]
      %v192 = vld [vmem:[%s165 + $0x7c] sm:$0xf]
      %v193 = vld [vmem:[%s165 + $0x84] sm:$0xf]
      %v194 = vld [vmem:[%s165 + $0x88] sm:$0xf]
      %v195 = vld [vmem:[%s165 + $0x90] sm:$0xf]
      %v196 = vld [vmem:[%s165 + $0x94] sm:$0xf]
      %v197 = vld [vmem:[%s165 + $0x9c] sm:$0xf]
      %v198 = vld [vmem:[%s165 + $0xa0] sm:$0xf]
      %v199 = vld [vmem:[%s165 + $0xa8] sm:$0xf]
      %v200 = vld [vmem:[%s165 + $0xac] sm:$0xf]
      %v201 = vld [vmem:[%s165 + $0xb4] sm:$0xf]
      %v202 = vld [vmem:[%s165 + $0xb8] sm:$0xf]
      %v203 = vld [vmem:[%s1] sm:$0xf]
      %v204 = vld [vmem:[%s165 + $0x8] sm:$0x1]
      %v205 = vld [vmem:[%s165 + $0x14] sm:$0x1]
      %v206 = vld [vmem:[%s165 + $0x20] sm:$0x1]
      %v207 = vld [vmem:[%s165 + $0x2c] sm:$0x1]
      %v208 = vld [vmem:[%s165 + $0x38] sm:$0x1]
      %v209 = vld [vmem:[%s165 + $0x44] sm:$0x1]
      %v210 = vld [vmem:[%s165 + $0x50] sm:$0x1]
      %v211 = vld [vmem:[%s165 + $0x5c] sm:$0x1]
      %v212 = vld [vmem:[%s165 + $0x68] sm:$0x1]
      %v213 = vld [vmem:[%s165 + $0x74] sm:$0x1]
      %v214 = vld [vmem:[%s165 + $0x80] sm:$0x1]
      %v215 = vld [vmem:[%s165 + $0x8c] sm:$0x1]
      %v216 = vld [vmem:[%s165 + $0x98] sm:$0x1]
      %v217 = vld [vmem:[%s165 + $0xa4] sm:$0x1]
      %v218 = vld [vmem:[%s165 + $0xb0] sm:$0x1]
      %v219 = vld [vmem:[%s165 + $0xbc] sm:$0x1]
      %vm220 = vsmask.f32 3328
      %vm221 = vsmask.f32 7440
      %vm222 = vmor %vm220, %vm221
      %v224 = vshrl.u32 %v171, 16
      %v226 = vrot.slane %v224, 4
      %v227 = vshll.u32 %v171, 16
      %v229 = vrot.slane %v227, 5
      %v230 = vor.u32 %v226, %v229
      %v231 = vrot.slane %v230, 4
      %v233 = vshll.u32 %v172, 16
      %v235 = vrot.slane %v233, 5
      %v236 = vsel %vm222, %v231, %v235
      %v237 = vshrl.u32 %v172, 16
      %v239 = vrot.slane %v237, 4
      %v240 = vor.u32 %v239, %v235
      %v241 = vrot.slane %v240, 4
      %v243 = vshll.u32 %v204, 16
      %v245 = vrot.slane %v243, 5
      %v246 = vsel %vm222, %v241, %v245
      %v248 = vshrl.u32 %v173, 16
      %v250 = vrot.slane %v248, 4
      %v251 = vshll.u32 %v173, 16
      %v253 = vrot.slane %v251, 5
      %v254 = vor.u32 %v250, %v253
      %v255 = vrot.slane %v254, 4
      %v257 = vshll.u32 %v174, 16
      %v259 = vrot.slane %v257, 5
      %v260 = vsel %vm222, %v255, %v259
      %v261 = vshrl.u32 %v174, 16
      %v263 = vrot.slane %v261, 4
      %v264 = vor.u32 %v263, %v259
      %v265 = vrot.slane %v264, 4
      %v267 = vshll.u32 %v205, 16
      %v269 = vrot.slane %v267, 5
      %v270 = vsel %vm222, %v265, %v269
      %v272 = vshrl.u32 %v175, 16
      %v274 = vrot.slane %v272, 4
      %v275 = vshll.u32 %v175, 16
      %v277 = vrot.slane %v275, 5
      %v278 = vor.u32 %v274, %v277
      %v279 = vrot.slane %v278, 4
      %v281 = vshll.u32 %v176, 16
      %v283 = vrot.slane %v281, 5
      %v284 = vsel %vm222, %v279, %v283
      %v285 = vshrl.u32 %v176, 16
      %v287 = vrot.slane %v285, 4
      %v288 = vor.u32 %v287, %v283
      %v289 = vrot.slane %v288, 4
      %v291 = vshll.u32 %v206, 16
      %v293 = vrot.slane %v291, 5
      %v294 = vsel %vm222, %v289, %v293
      %v296 = vshrl.u32 %v177, 16
      %v298 = vrot.slane %v296, 4
      %v299 = vshll.u32 %v177, 16
      %v301 = vrot.slane %v299, 5
      %v302 = vor.u32 %v298, %v301
      %v303 = vrot.slane %v302, 4
      %v305 = vshll.u32 %v178, 16
      %v307 = vrot.slane %v305, 5
      %v308 = vsel %vm222, %v303, %v307
      %v309 = vshrl.u32 %v178, 16
      %v311 = vrot.slane %v309, 4
      %v312 = vor.u32 %v311, %v307
      %v313 = vrot.slane %v312, 4
      %v315 = vshll.u32 %v207, 16
      %v317 = vrot.slane %v315, 5
      %v318 = vsel %vm222, %v313, %v317
      %v320 = vshrl.u32 %v179, 16
      %v322 = vrot.slane %v320, 4
      %v323 = vshll.u32 %v179, 16
      %v325 = vrot.slane %v323, 5
      %v326 = vor.u32 %v322, %v325
      %v327 = vrot.slane %v326, 4
      %v329 = vshll.u32 %v180, 16
      %v331 = vrot.slane %v329, 5
      %v332 = vsel %vm222, %v327, %v331
      %v333 = vshrl.u32 %v180, 16
      %v335 = vrot.slane %v333, 4
      %v336 = vor.u32 %v335, %v331
      %v337 = vrot.slane %v336, 4
      %v339 = vshll.u32 %v208, 16
      %v341 = vrot.slane %v339, 5
      %v342 = vsel %vm222, %v337, %v341
      %v344 = vshrl.u32 %v181, 16
      %v346 = vrot.slane %v344, 4
      %v347 = vshll.u32 %v181, 16
      %v349 = vrot.slane %v347, 5
      %v350 = vor.u32 %v346, %v349
      %v351 = vrot.slane %v350, 4
      %v353 = vshll.u32 %v182, 16
      %v355 = vrot.slane %v353, 5
      %v356 = vsel %vm222, %v351, %v355
      %v357 = vshrl.u32 %v182, 16
      %v359 = vrot.slane %v357, 4
      %v360 = vor.u32 %v359, %v355
      %v361 = vrot.slane %v360, 4
      %v363 = vshll.u32 %v209, 16
      %v365 = vrot.slane %v363, 5
      %v366 = vsel %vm222, %v361, %v365
      %v368 = vshrl.u32 %v183, 16
      %v370 = vrot.slane %v368, 4
      %v371 = vshll.u32 %v183, 16
      %v373 = vrot.slane %v371, 5
      %v374 = vor.u32 %v370, %v373
      %v375 = vrot.slane %v374, 4
      %v377 = vshll.u32 %v184, 16
      %v379 = vrot.slane %v377, 5
      %v380 = vsel %vm222, %v375, %v379
      %v381 = vshrl.u32 %v184, 16
      %v383 = vrot.slane %v381, 4
      %v384 = vor.u32 %v383, %v379
      %v385 = vrot.slane %v384, 4
      %v387 = vshll.u32 %v210, 16
      %v389 = vrot.slane %v387, 5
      %v390 = vsel %vm222, %v385, %v389
      %v392 = vshrl.u32 %v185, 16
      %v394 = vrot.slane %v392, 4
      %v395 = vshll.u32 %v185, 16
      %v397 = vrot.slane %v395, 5
      %v398 = vor.u32 %v394, %v397
      %v399 = vrot.slane %v398, 4
      %v401 = vshll.u32 %v186, 16
      %v403 = vrot.slane %v401, 5
      %v404 = vsel %vm222, %v399, %v403
      %v405 = vshrl.u32 %v186, 16
      %v407 = vrot.slane %v405, 4
      %v408 = vor.u32 %v407, %v403
      %v409 = vrot.slane %v408, 4
      %v411 = vshll.u32 %v211, 16
      %v413 = vrot.slane %v411, 5
      %v414 = vsel %vm222, %v409, %v413
      %v416 = vshrl.u32 %v187, 16
      %v418 = vrot.slane %v416, 4
      %v419 = vshll.u32 %v187, 16
      %v421 = vrot.slane %v419, 5
      %v422 = vor.u32 %v418, %v421
      %v423 = vrot.slane %v422, 4
      %v425 = vshll.u32 %v188, 16
      %v427 = vrot.slane %v425, 5
      %v428 = vsel %vm222, %v423, %v427
      %v429 = vshrl.u32 %v188, 16
      %v431 = vrot.slane %v429, 4
      %v432 = vor.u32 %v431, %v427
      %v433 = vrot.slane %v432, 4
      %v435 = vshll.u32 %v212, 16
      %v437 = vrot.slane %v435, 5
      %v438 = vsel %vm222, %v433, %v437
      %v440 = vshrl.u32 %v189, 16
      %v442 = vrot.slane %v440, 4
      %v443 = vshll.u32 %v189, 16
      %v445 = vrot.slane %v443, 5
      %v446 = vor.u32 %v442, %v445
      %v447 = vrot.slane %v446, 4
      %v449 = vshll.u32 %v190, 16
      %v451 = vrot.slane %v449, 5
      %v452 = vsel %vm222, %v447, %v451
      %v453 = vshrl.u32 %v190, 16
      %v455 = vrot.slane %v453, 4
      %v456 = vor.u32 %v455, %v451
      %v457 = vrot.slane %v456, 4
      %v459 = vshll.u32 %v213, 16
      %v461 = vrot.slane %v459, 5
      %v462 = vsel %vm222, %v457, %v461
      %v464 = vshrl.u32 %v191, 16
      %v466 = vrot.slane %v464, 4
      %v467 = vshll.u32 %v191, 16
      %v469 = vrot.slane %v467, 5
      %v470 = vor.u32 %v466, %v469
      %v471 = vrot.slane %v470, 4
      %v473 = vshll.u32 %v192, 16
      %v475 = vrot.slane %v473, 5
      %v476 = vsel %vm222, %v471, %v475
      %v477 = vshrl.u32 %v192, 16
      %v479 = vrot.slane %v477, 4
      %v480 = vor.u32 %v479, %v475
      %v481 = vrot.slane %v480, 4
      %v483 = vshll.u32 %v214, 16
      %v485 = vrot.slane %v483, 5
      %v486 = vsel %vm222, %v481, %v485
      %v488 = vshrl.u32 %v193, 16
      %v490 = vrot.slane %v488, 4
      %v491 = vshll.u32 %v193, 16
      %v493 = vrot.slane %v491, 5
      %v494 = vor.u32 %v490, %v493
      %v495 = vrot.slane %v494, 4
      %v497 = vshll.u32 %v194, 16
      %v499 = vrot.slane %v497, 5
      %v500 = vsel %vm222, %v495, %v499
      %v501 = vshrl.u32 %v194, 16
      %v503 = vrot.slane %v501, 4
      %v504 = vor.u32 %v503, %v499
      %v505 = vrot.slane %v504, 4
      %v507 = vshll.u32 %v215, 16
      %v509 = vrot.slane %v507, 5
      %v510 = vsel %vm222, %v505, %v509
      %v512 = vshrl.u32 %v195, 16
      %v514 = vrot.slane %v512, 4
      %v515 = vshll.u32 %v195, 16
      %v517 = vrot.slane %v515, 5
      %v518 = vor.u32 %v514, %v517
      %v519 = vrot.slane %v518, 4
      %v521 = vshll.u32 %v196, 16
      %v523 = vrot.slane %v521, 5
      %v524 = vsel %vm222, %v519, %v523
      %v525 = vshrl.u32 %v196, 16
      %v527 = vrot.slane %v525, 4
      %v528 = vor.u32 %v527, %v523
      %v529 = vrot.slane %v528, 4
      %v531 = vshll.u32 %v216, 16
      %v533 = vrot.slane %v531, 5
      %v534 = vsel %vm222, %v529, %v533
      %v536 = vshrl.u32 %v197, 16
      %v538 = vrot.slane %v536, 4
      %v539 = vshll.u32 %v197, 16
      %v541 = vrot.slane %v539, 5
      %v542 = vor.u32 %v538, %v541
      %v543 = vrot.slane %v542, 4
      %v545 = vshll.u32 %v198, 16
      %v547 = vrot.slane %v545, 5
      %v548 = vsel %vm222, %v543, %v547
      %v549 = vshrl.u32 %v198, 16
      %v551 = vrot.slane %v549, 4
      %v552 = vor.u32 %v551, %v547
      %v553 = vrot.slane %v552, 4
      %v555 = vshll.u32 %v217, 16
      %v557 = vrot.slane %v555, 5
      %v558 = vsel %vm222, %v553, %v557
      %v560 = vshrl.u32 %v199, 16
      %v562 = vrot.slane %v560, 4
      %v563 = vshll.u32 %v199, 16
      %v565 = vrot.slane %v563, 5
      %v566 = vor.u32 %v562, %v565
      %v567 = vrot.slane %v566, 4
      %v569 = vshll.u32 %v200, 16
      %v571 = vrot.slane %v569, 5
      %v572 = vsel %vm222, %v567, %v571
      %v573 = vshrl.u32 %v200, 16
      %v575 = vrot.slane %v573, 4
      %v576 = vor.u32 %v575, %v571
      %v577 = vrot.slane %v576, 4
      %v579 = vshll.u32 %v218, 16
      %v581 = vrot.slane %v579, 5
      %v582 = vsel %vm222, %v577, %v581
      %v584 = vshrl.u32 %v201, 16
      %v586 = vrot.slane %v584, 4
      %v587 = vshll.u32 %v201, 16
      %v589 = vrot.slane %v587, 5
      %v590 = vor.u32 %v586, %v589
      %v591 = vrot.slane %v590, 4
      %v593 = vshll.u32 %v202, 16
      %v595 = vrot.slane %v593, 5
      %v596 = vsel %vm222, %v591, %v595
      %v597 = vshrl.u32 %v202, 16
      %v599 = vrot.slane %v597, 4
      %v600 = vor.u32 %v599, %v595
      %v601 = vrot.slane %v600, 4
      %v603 = vshll.u32 %v219, 16
      %v605 = vrot.slane %v603, 5
      %v606 = vsel %vm222, %v601, %v605
      %s607 = scalar_lea.vmem %s1, 4
      %v608 = vld [vmem:[%s607] sm:$0xf]
      %v609 = vunpack.c.l.b16 %v236
      %v610 = vunpack.c.l.b16 %v246
      %v611 = vunpack.c.l.b16 %v260
      %v612 = vunpack.c.l.b16 %v270
      %v613 = vunpack.c.l.b16 %v284
      %v614 = vunpack.c.l.b16 %v294
      %v615 = vunpack.c.l.b16 %v308
      %v616 = vunpack.c.l.b16 %v318
      %v617 = vunpack.c.l.b16 %v332
      %v618 = vunpack.c.l.b16 %v342
      %v619 = vunpack.c.l.b16 %v356
      %v620 = vunpack.c.l.b16 %v366
      %v621 = vunpack.c.l.b16 %v380
      %v622 = vunpack.c.l.b16 %v390
      %v623 = vunpack.c.l.b16 %v404
      %v624 = vunpack.c.l.b16 %v414
      %v625 = vunpack.c.l.b16 %v428
      %v626 = vunpack.c.l.b16 %v438
      %v627 = vunpack.c.l.b16 %v452
      %v628 = vunpack.c.l.b16 %v462
      %v629 = vunpack.c.l.b16 %v476
      %v630 = vunpack.c.l.b16 %v486
      %v631 = vunpack.c.l.b16 %v500
      %v632 = vunpack.c.l.b16 %v510
      %v633 = vunpack.c.l.b16 %v524
      %v634 = vunpack.c.l.b16 %v534
      %v635 = vunpack.c.l.b16 %v548
      %v636 = vunpack.c.l.b16 %v558
      %v637 = vunpack.c.l.b16 %v572
      %v638 = vunpack.c.l.b16 %v582
      %v639 = vunpack.c.l.b16 %v596
      %v640 = vunpack.c.l.b16 %v606
      %v641 = vpack.c.b16 %v610, %v609
      %v642 = vpack.c.b16 %v612, %v611
      %v643 = vpack.c.b16 %v614, %v613
      %v644 = vpack.c.b16 %v616, %v615
      %v645 = vpack.c.b16 %v618, %v617
      %v646 = vpack.c.b16 %v620, %v619
      %v647 = vpack.c.b16 %v622, %v621
      %v648 = vpack.c.b16 %v624, %v623
      %v649 = vpack.c.b16 %v626, %v625
      %v650 = vpack.c.b16 %v628, %v627
      %v651 = vpack.c.b16 %v630, %v629
      %v652 = vpack.c.b16 %v632, %v631
      %v653 = vpack.c.b16 %v634, %v633
      %v654 = vpack.c.b16 %v636, %v635
      %v655 = vpack.c.b16 %v638, %v637
      %v656 = vpack.c.b16 %v640, %v639
      %vm657 = vcmask 31744
      %v659 = vsel %vm657, %v608, 0
      %v662 = vsel %vm657, %v641, 0
      %v665 = vsel %vm657, %v642, 0
      %v668 = vsel %vm657, %v643, 0
      %v671 = vsel %vm657, %v644, 0
      %v674 = vsel %vm657, %v645, 0
      %v677 = vsel %vm657, %v646, 0
      %v680 = vsel %vm657, %v647, 0
      %v683 = vsel %vm657, %v648, 0
      %v686 = vsel %vm657, %v649, 0
      %v689 = vsel %vm657, %v650, 0
      %v692 = vsel %vm657, %v651, 0
      %v695 = vsel %vm657, %v652, 0
      %v698 = vsel %vm657, %v653, 0
      %v701 = vsel %vm657, %v654, 0
      %v704 = vsel %vm657, %v655, 0
      %v707 = vsel %vm657, %v656, 0
      %709 = vmatpush.bf16.xpose.msra.mxu0 %v683
      %710 = vmatpush.bf16.xpose.msra.mxu0 %v680
      %711 = vmatpush.bf16.xpose.msra.mxu0 %v677
      %712 = vmatpush.bf16.xpose.msra.mxu0 %v674
      %713 = vmatpush.bf16.xpose.msra.mxu0 %v671
      %714 = vmatpush.bf16.xpose.msra.mxu0 %v668
      %715 = vmatpush.bf16.xpose.msra.mxu0 %v665
      %716 = vmatpush.bf16.xpose.msra.mxu0 %v662
      %717 = vmatmul.bf16.gmra.mxu0 %v659
      %v718 = vpop.f32.mrf.mxu0
      %v719 = vadd.f32 0.0, %v718
      %v720 = vpop.f32.mrf.mxu0
      %721 = vdwg.mxu0
      %722 = vmatpush.bf16.xpose.msra.mxu0 %v707
      %723 = vmatpush.bf16.xpose.msra.mxu0 %v704
      %724 = vmatpush.bf16.xpose.msra.mxu0 %v701
      %725 = vmatpush.bf16.xpose.msra.mxu0 %v698
      %726 = vmatpush.bf16.xpose.msra.mxu0 %v695
      %727 = vmatpush.bf16.xpose.msra.mxu0 %v692
      %728 = vmatpush.bf16.xpose.msra.mxu0 %v689
      %729 = vmatpush.bf16.xpose.msra.mxu0 %v686
      %730 = vmatmul.bf16.gmra.mxu0 %v659
      %v731 = vpop.f32.mrf.mxu0
      %v732 = vadd.f32 0.0, %v731
      %v733 = vpop.f32.mrf.mxu0
      %734 = vdwg.mxu0
      %v767 = vunpack.c.l.b16 %v171
      %v768 = vunpack.c.l.b16 %v172
      %v769 = vunpack.c.l.b16 %v173
      %v770 = vunpack.c.l.b16 %v174
      %v771 = vunpack.c.l.b16 %v175
      %v772 = vunpack.c.l.b16 %v176
      %v773 = vunpack.c.l.b16 %v177
      %v774 = vunpack.c.l.b16 %v178
      %v775 = vunpack.c.l.b16 %v179
      %v776 = vunpack.c.l.b16 %v180
      %v777 = vunpack.c.l.b16 %v181
      %v778 = vunpack.c.l.b16 %v182
      %v779 = vunpack.c.l.b16 %v183
      %v780 = vunpack.c.l.b16 %v184
      %v781 = vunpack.c.l.b16 %v185
      %v782 = vunpack.c.l.b16 %v186
      %v783 = vunpack.c.l.b16 %v187
      %v784 = vunpack.c.l.b16 %v188
      %v785 = vunpack.c.l.b16 %v189
      %v786 = vunpack.c.l.b16 %v190
      %v787 = vunpack.c.l.b16 %v191
      %v788 = vunpack.c.l.b16 %v192
      %v789 = vunpack.c.l.b16 %v193
      %v790 = vunpack.c.l.b16 %v194
      %v791 = vunpack.c.l.b16 %v195
      %v792 = vunpack.c.l.b16 %v196
      %v793 = vunpack.c.l.b16 %v197
      %v794 = vunpack.c.l.b16 %v198
      %v795 = vunpack.c.l.b16 %v199
      %v796 = vunpack.c.l.b16 %v200
      %v797 = vunpack.c.l.b16 %v201
      %v798 = vunpack.c.l.b16 %v202
      %v799 = vpack.c.b16 %v768, %v767
      %v800 = vpack.c.b16 %v770, %v769
      %v801 = vpack.c.b16 %v772, %v771
      %v802 = vpack.c.b16 %v774, %v773
      %v803 = vpack.c.b16 %v776, %v775
      %v804 = vpack.c.b16 %v778, %v777
      %v805 = vpack.c.b16 %v780, %v779
      %v806 = vpack.c.b16 %v782, %v781
      %v807 = vpack.c.b16 %v784, %v783
      %v808 = vpack.c.b16 %v786, %v785
      %v809 = vpack.c.b16 %v788, %v787
      %v810 = vpack.c.b16 %v790, %v789
      %v811 = vpack.c.b16 %v792, %v791
      %v812 = vpack.c.b16 %v794, %v793
      %v813 = vpack.c.b16 %v796, %v795
      %v814 = vpack.c.b16 %v798, %v797
      %v816 = vsel %vm657, %v203, 0
      %v819 = vsel %vm657, %v799, 0
      %v822 = vsel %vm657, %v800, 0
      %v825 = vsel %vm657, %v801, 0
      %v828 = vsel %vm657, %v802, 0
      %v831 = vsel %vm657, %v803, 0
      %v834 = vsel %vm657, %v804, 0
      %v837 = vsel %vm657, %v805, 0
      %v840 = vsel %vm657, %v806, 0
      %v843 = vsel %vm657, %v807, 0
      %v846 = vsel %vm657, %v808, 0
      %v849 = vsel %vm657, %v809, 0
      %v852 = vsel %vm657, %v810, 0
      %v855 = vsel %vm657, %v811, 0
      %v858 = vsel %vm657, %v812, 0
      %v861 = vsel %vm657, %v813, 0
      %v864 = vsel %vm657, %v814, 0
      %866 = vmatpush.bf16.xpose.msra.mxu0 %v840
      %867 = vmatpush.bf16.xpose.msra.mxu0 %v837
      %868 = vmatpush.bf16.xpose.msra.mxu0 %v834
      %869 = vmatpush.bf16.xpose.msra.mxu0 %v831
      %870 = vmatpush.bf16.xpose.msra.mxu0 %v828
      %871 = vmatpush.bf16.xpose.msra.mxu0 %v825
      %872 = vmatpush.bf16.xpose.msra.mxu0 %v822
      %873 = vmatpush.bf16.xpose.msra.mxu0 %v819
      %874 = vmatmul.bf16.gmra.mxu0 %v816
      %v875 = vpop.f32.mrf.mxu0
      %v876 = vadd.f32 %v719, %v875
      %v877 = vpop.f32.mrf.mxu0
      %878 = vdwg.mxu0
      %879 = vmatpush.bf16.xpose.msra.mxu0 %v864
      %880 = vmatpush.bf16.xpose.msra.mxu0 %v861
      %881 = vmatpush.bf16.xpose.msra.mxu0 %v858
      %882 = vmatpush.bf16.xpose.msra.mxu0 %v855
      %883 = vmatpush.bf16.xpose.msra.mxu0 %v852
      %884 = vmatpush.bf16.xpose.msra.mxu0 %v849
      %885 = vmatpush.bf16.xpose.msra.mxu0 %v846
      %886 = vmatpush.bf16.xpose.msra.mxu0 %v843
      %887 = vmatmul.bf16.gmra.mxu0 %v816
      %v888 = vpop.f32.mrf.mxu0
      %v889 = vadd.f32 %v732, %v888
      %v890 = vpop.f32.mrf.mxu0
      %891 = vdwg.mxu0
      %v892 = vld [vmem:[%s165] sm:$0xe]
      %v893 = vld [vmem:[%s165 + $0xc] sm:$0xe]
      %v894 = vld [vmem:[%s165 + $0x18] sm:$0xe]
      %v895 = vld [vmem:[%s165 + $0x24] sm:$0xe]
      %v896 = vld [vmem:[%s165 + $0x30] sm:$0xe]
      %v897 = vld [vmem:[%s165 + $0x3c] sm:$0xe]
      %v898 = vld [vmem:[%s165 + $0x48] sm:$0xe]
      %v899 = vld [vmem:[%s165 + $0x54] sm:$0xe]
      %v900 = vld [vmem:[%s165 + $0x60] sm:$0xe]
      %v901 = vld [vmem:[%s165 + $0x6c] sm:$0xe]
      %v902 = vld [vmem:[%s165 + $0x78] sm:$0xe]
      %v903 = vld [vmem:[%s165 + $0x84] sm:$0xe]
      %v904 = vld [vmem:[%s165 + $0x90] sm:$0xe]
      %v905 = vld [vmem:[%s165 + $0x9c] sm:$0xe]
      %v906 = vld [vmem:[%s165 + $0xa8] sm:$0xe]
      %v907 = vld [vmem:[%s165 + $0xb4] sm:$0xe]
      %vm940 = vcmask 1042432
      %vm941 = vcmask 1046532
      %vm942 = vmor %vm940, %vm941
      %v943 = vrot.slane %v892, 5
      %v944 = vrot.slane %v943, 4
      %v945 = vrot.slane %v172, 5
      %v946 = vsel %vm942, %v944, %v945
      %v947 = vrot.slane %v945, 4
      %v948 = vrot.slane %v204, 5
      %v949 = vsel %vm942, %v947, %v948
      %v950 = vrot.slane %v893, 5
      %v951 = vrot.slane %v950, 4
      %v952 = vrot.slane %v174, 5
      %v953 = vsel %vm942, %v951, %v952
      %v954 = vrot.slane %v952, 4
      %v955 = vrot.slane %v205, 5
      %v956 = vsel %vm942, %v954, %v955
      %v957 = vrot.slane %v894, 5
      %v958 = vrot.slane %v957, 4
      %v959 = vrot.slane %v176, 5
      %v960 = vsel %vm942, %v958, %v959
      %v961 = vrot.slane %v959, 4
      %v962 = vrot.slane %v206, 5
      %v963 = vsel %vm942, %v961, %v962
      %v964 = vrot.slane %v895, 5
      %v965 = vrot.slane %v964, 4
      %v966 = vrot.slane %v178, 5
      %v967 = vsel %vm942, %v965, %v966
      %v968 = vrot.slane %v966, 4
      %v969 = vrot.slane %v207, 5
      %v970 = vsel %vm942, %v968, %v969
      %v971 = vrot.slane %v896, 5
      %v972 = vrot.slane %v971, 4
      %v973 = vrot.slane %v180, 5
      %v974 = vsel %vm942, %v972, %v973
      %v975 = vrot.slane %v973, 4
      %v976 = vrot.slane %v208, 5
      %v977 = vsel %vm942, %v975, %v976
      %v978 = vrot.slane %v897, 5
      %v979 = vrot.slane %v978, 4
      %v980 = vrot.slane %v182, 5
      %v981 = vsel %vm942, %v979, %v980
      %v982 = vrot.slane %v980, 4
      %v983 = vrot.slane %v209, 5
      %v984 = vsel %vm942, %v982, %v983
      %v985 = vrot.slane %v898, 5
      %v986 = vrot.slane %v985, 4
      %v987 = vrot.slane %v184, 5
      %v988 = vsel %vm942, %v986, %v987
      %v989 = vrot.slane %v987, 4
      %v990 = vrot.slane %v210, 5
      %v991 = vsel %vm942, %v989, %v990
      %v992 = vrot.slane %v899, 5
      %v993 = vrot.slane %v992, 4
      %v994 = vrot.slane %v186, 5
      %v995 = vsel %vm942, %v993, %v994
      %v996 = vrot.slane %v994, 4
      %v997 = vrot.slane %v211, 5
      %v998 = vsel %vm942, %v996, %v997
      %v999 = vrot.slane %v900, 5
      %v1000 = vrot.slane %v999, 4
      %v1001 = vrot.slane %v188, 5
      %v1002 = vsel %vm942, %v1000, %v1001
      %v1003 = vrot.slane %v1001, 4
      %v1004 = vrot.slane %v212, 5
      %v1005 = vsel %vm942, %v1003, %v1004
      %v1006 = vrot.slane %v901, 5
      %v1007 = vrot.slane %v1006, 4
      %v1008 = vrot.slane %v190, 5
      %v1009 = vsel %vm942, %v1007, %v1008
      %v1010 = vrot.slane %v1008, 4
      %v1011 = vrot.slane %v213, 5
      %v1012 = vsel %vm942, %v1010, %v1011
      %v1013 = vrot.slane %v902, 5
      %v1014 = vrot.slane %v1013, 4
      %v1015 = vrot.slane %v192, 5
      %v1016 = vsel %vm942, %v1014, %v1015
      %v1017 = vrot.slane %v1015, 4
      %v1018 = vrot.slane %v214, 5
      %v1019 = vsel %vm942, %v1017, %v1018
      %v1020 = vrot.slane %v903, 5
      %v1021 = vrot.slane %v1020, 4
      %v1022 = vrot.slane %v194, 5
      %v1023 = vsel %vm942, %v1021, %v1022
      %v1024 = vrot.slane %v1022, 4
      %v1025 = vrot.slane %v215, 5
      %v1026 = vsel %vm942, %v1024, %v1025
      %v1027 = vrot.slane %v904, 5
      %v1028 = vrot.slane %v1027, 4
      %v1029 = vrot.slane %v196, 5
      %v1030 = vsel %vm942, %v1028, %v1029
      %v1031 = vrot.slane %v1029, 4
      %v1032 = vrot.slane %v216, 5
      %v1033 = vsel %vm942, %v1031, %v1032
      %v1034 = vrot.slane %v905, 5
      %v1035 = vrot.slane %v1034, 4
      %v1036 = vrot.slane %v198, 5
      %v1037 = vsel %vm942, %v1035, %v1036
      %v1038 = vrot.slane %v1036, 4
      %v1039 = vrot.slane %v217, 5
      %v1040 = vsel %vm942, %v1038, %v1039
      %v1041 = vrot.slane %v906, 5
      %v1042 = vrot.slane %v1041, 4
      %v1043 = vrot.slane %v200, 5
      %v1044 = vsel %vm942, %v1042, %v1043
      %v1045 = vrot.slane %v1043, 4
      %v1046 = vrot.slane %v218, 5
      %v1047 = vsel %vm942, %v1045, %v1046
      %v1048 = vrot.slane %v907, 5
      %v1049 = vrot.slane %v1048, 4
      %v1050 = vrot.slane %v202, 5
      %v1051 = vsel %vm942, %v1049, %v1050
      %v1052 = vrot.slane %v1050, 4
      %v1053 = vrot.slane %v219, 5
      %v1054 = vsel %vm942, %v1052, %v1053
      %s1055 = scalar_lea.vmem %s1, 8
      %v1056 = vld [vmem:[%s1055] sm:$0xf]
      %v1057 = vunpack.c.l.b16 %v946
      %v1058 = vunpack.c.l.b16 %v949
      %v1059 = vunpack.c.l.b16 %v953
      %v1060 = vunpack.c.l.b16 %v956
      %v1061 = vunpack.c.l.b16 %v960
      %v1062 = vunpack.c.l.b16 %v963
      %v1063 = vunpack.c.l.b16 %v967
      %v1064 = vunpack.c.l.b16 %v970
      %v1065 = vunpack.c.l.b16 %v974
      %v1066 = vunpack.c.l.b16 %v977
      %v1067 = vunpack.c.l.b16 %v981
      %v1068 = vunpack.c.l.b16 %v984
      %v1069 = vunpack.c.l.b16 %v988
      %v1070 = vunpack.c.l.b16 %v991
      %v1071 = vunpack.c.l.b16 %v995
      %v1072 = vunpack.c.l.b16 %v998
      %v1073 = vunpack.c.l.b16 %v1002
      %v1074 = vunpack.c.l.b16 %v1005
      %v1075 = vunpack.c.l.b16 %v1009
      %v1076 = vunpack.c.l.b16 %v1012
      %v1077 = vunpack.c.l.b16 %v1016
      %v1078 = vunpack.c.l.b16 %v1019
      %v1079 = vunpack.c.l.b16 %v1023
      %v1080 = vunpack.c.l.b16 %v1026
      %v1081 = vunpack.c.l.b16 %v1030
      %v1082 = vunpack.c.l.b16 %v1033
      %v1083 = vunpack.c.l.b16 %v1037
      %v1084 = vunpack.c.l.b16 %v1040
      %v1085 = vunpack.c.l.b16 %v1044
      %v1086 = vunpack.c.l.b16 %v1047
      %v1087 = vunpack.c.l.b16 %v1051
      %v1088 = vunpack.c.l.b16 %v1054
      %v1089 = vpack.c.b16 %v1058, %v1057
      %v1090 = vpack.c.b16 %v1060, %v1059
      %v1091 = vpack.c.b16 %v1062, %v1061
      %v1092 = vpack.c.b16 %v1064, %v1063
      %v1093 = vpack.c.b16 %v1066, %v1065
      %v1094 = vpack.c.b16 %v1068, %v1067
      %v1095 = vpack.c.b16 %v1070, %v1069
      %v1096 = vpack.c.b16 %v1072, %v1071
      %v1097 = vpack.c.b16 %v1074, %v1073
      %v1098 = vpack.c.b16 %v1076, %v1075
      %v1099 = vpack.c.b16 %v1078, %v1077
      %v1100 = vpack.c.b16 %v1080, %v1079
      %v1101 = vpack.c.b16 %v1082, %v1081
      %v1102 = vpack.c.b16 %v1084, %v1083
      %v1103 = vpack.c.b16 %v1086, %v1085
      %v1104 = vpack.c.b16 %v1088, %v1087
      %v1106 = vsel %vm657, %v1056, 0
      %v1109 = vsel %vm657, %v1089, 0
      %v1112 = vsel %vm657, %v1090, 0
      %v1115 = vsel %vm657, %v1091, 0
      %v1118 = vsel %vm657, %v1092, 0
      %v1121 = vsel %vm657, %v1093, 0
      %v1124 = vsel %vm657, %v1094, 0
      %v1127 = vsel %vm657, %v1095, 0
      %v1130 = vsel %vm657, %v1096, 0
      %v1133 = vsel %vm657, %v1097, 0
      %v1136 = vsel %vm657, %v1098, 0
      %v1139 = vsel %vm657, %v1099, 0
      %v1142 = vsel %vm657, %v1100, 0
      %v1145 = vsel %vm657, %v1101, 0
      %v1148 = vsel %vm657, %v1102, 0
      %v1151 = vsel %vm657, %v1103, 0
      %v1154 = vsel %vm657, %v1104, 0
      %1156 = vmatpush.bf16.xpose.msra.mxu0 %v1130
      %1157 = vmatpush.bf16.xpose.msra.mxu0 %v1127
      %1158 = vmatpush.bf16.xpose.msra.mxu0 %v1124
      %1159 = vmatpush.bf16.xpose.msra.mxu0 %v1121
      %1160 = vmatpush.bf16.xpose.msra.mxu0 %v1118
      %1161 = vmatpush.bf16.xpose.msra.mxu0 %v1115
      %1162 = vmatpush.bf16.xpose.msra.mxu0 %v1112
      %1163 = vmatpush.bf16.xpose.msra.mxu0 %v1109
      %1164 = vmatmul.bf16.gmra.mxu0 %v1106
      %v1165 = vpop.f32.mrf.mxu0
      %v1166 = vadd.f32 0.0, %v1165
      %v1167 = vpop.f32.mrf.mxu0
      %1168 = vdwg.mxu0
      %1169 = vmatpush.bf16.xpose.msra.mxu0 %v1154
      %1170 = vmatpush.bf16.xpose.msra.mxu0 %v1151
      %1171 = vmatpush.bf16.xpose.msra.mxu0 %v1148
      %1172 = vmatpush.bf16.xpose.msra.mxu0 %v1145
      %1173 = vmatpush.bf16.xpose.msra.mxu0 %v1142
      %1174 = vmatpush.bf16.xpose.msra.mxu0 %v1139
      %1175 = vmatpush.bf16.xpose.msra.mxu0 %v1136
      %1176 = vmatpush.bf16.xpose.msra.mxu0 %v1133
      %1177 = vmatmul.bf16.gmra.mxu0 %v1106
      %v1178 = vpop.f32.mrf.mxu0
      %v1179 = vadd.f32 0.0, %v1178
      %v1180 = vpop.f32.mrf.mxu0
      %1181 = vdwg.mxu0
      %v1182 = vadd.f32 %v876, %v1166
      %v1183 = vadd.f32 %v889, %v1179
      %s1184 = scalar_lea.vmem %s165, 12
      %v1185 = vld [vmem:[%s1184] sm:$0xf]
      %v1186 = vld [vmem:[%s1184 + $0x4] sm:$0xf]
      %v1187 = vld [vmem:[%s1184 + $0xc] sm:$0xf]
      %v1188 = vld [vmem:[%s1184 + $0x10] sm:$0xf]
      %v1189 = vld [vmem:[%s1184 + $0x18] sm:$0xf]
      %v1190 = vld [vmem:[%s1184 + $0x1c] sm:$0xf]
      %v1191 = vld [vmem:[%s1184 + $0x24] sm:$0xf]
      %v1192 = vld [vmem:[%s1184 + $0x28] sm:$0xf]
      %v1193 = vld [vmem:[%s1184 + $0x30] sm:$0xf]
      %v1194 = vld [vmem:[%s1184 + $0x34] sm:$0xf]
      %v1195 = vld [vmem:[%s1184 + $0x3c] sm:$0xf]
      %v1196 = vld [vmem:[%s1184 + $0x40] sm:$0xf]
      %v1197 = vld [vmem:[%s1184 + $0x48] sm:$0xf]
      %v1198 = vld [vmem:[%s1184 + $0x4c] sm:$0xf]
      %v1199 = vld [vmem:[%s1184 + $0x54] sm:$0xf]
      %v1200 = vld [vmem:[%s1184 + $0x58] sm:$0xf]
      %v1201 = vld [vmem:[%s1184 + $0x60] sm:$0xf]
      %v1202 = vld [vmem:[%s1184 + $0x64] sm:$0xf]
      %v1203 = vld [vmem:[%s1184 + $0x6c] sm:$0xf]
      %v1204 = vld [vmem:[%s1184 + $0x70] sm:$0xf]
      %v1205 = vld [vmem:[%s1184 + $0x78] sm:$0xf]
      %v1206 = vld [vmem:[%s1184 + $0x7c] sm:$0xf]
      %v1207 = vld [vmem:[%s1184 + $0x84] sm:$0xf]
      %v1208 = vld [vmem:[%s1184 + $0x88] sm:$0xf]
      %v1209 = vld [vmem:[%s1184 + $0x90] sm:$0xf]
      %v1210 = vld [vmem:[%s1184 + $0x94] sm:$0xf]
      %v1211 = vld [vmem:[%s1184 + $0x9c] sm:$0xf]
      %v1212 = vld [vmem:[%s1184 + $0xa0] sm:$0xf]
      %v1213 = vld [vmem:[%s1184 + $0xa8] sm:$0xf]
      %v1214 = vld [vmem:[%s1184 + $0xac] sm:$0xf]
      %v1215 = vld [vmem:[%s1184 + $0xb4] sm:$0xf]
      %v1216 = vld [vmem:[%s1184 + $0xb8] sm:$0xf]
      %s1217 = scalar_lea.vmem %s1, 12
      %v1218 = vld [vmem:[%s1217] sm:$0xf]
      %v1251 = vunpack.c.l.b16 %v1185
      %v1252 = vunpack.c.l.b16 %v1186
      %v1253 = vunpack.c.l.b16 %v1187
      %v1254 = vunpack.c.l.b16 %v1188
      %v1255 = vunpack.c.l.b16 %v1189
      %v1256 = vunpack.c.l.b16 %v1190
      %v1257 = vunpack.c.l.b16 %v1191
      %v1258 = vunpack.c.l.b16 %v1192
      %v1259 = vunpack.c.l.b16 %v1193
      %v1260 = vunpack.c.l.b16 %v1194
      %v1261 = vunpack.c.l.b16 %v1195
      %v1262 = vunpack.c.l.b16 %v1196
      %v1263 = vunpack.c.l.b16 %v1197
      %v1264 = vunpack.c.l.b16 %v1198
      %v1265 = vunpack.c.l.b16 %v1199
      %v1266 = vunpack.c.l.b16 %v1200
      %v1267 = vunpack.c.l.b16 %v1201
      %v1268 = vunpack.c.l.b16 %v1202
      %v1269 = vunpack.c.l.b16 %v1203
      %v1270 = vunpack.c.l.b16 %v1204
      %v1271 = vunpack.c.l.b16 %v1205
      %v1272 = vunpack.c.l.b16 %v1206
      %v1273 = vunpack.c.l.b16 %v1207
      %v1274 = vunpack.c.l.b16 %v1208
      %v1275 = vunpack.c.l.b16 %v1209
      %v1276 = vunpack.c.l.b16 %v1210
      %v1277 = vunpack.c.l.b16 %v1211
      %v1278 = vunpack.c.l.b16 %v1212
      %v1279 = vunpack.c.l.b16 %v1213
      %v1280 = vunpack.c.l.b16 %v1214
      %v1281 = vunpack.c.l.b16 %v1215
      %v1282 = vunpack.c.l.b16 %v1216
      %v1283 = vpack.c.b16 %v1252, %v1251
      %v1284 = vpack.c.b16 %v1254, %v1253
      %v1285 = vpack.c.b16 %v1256, %v1255
      %v1286 = vpack.c.b16 %v1258, %v1257
      %v1287 = vpack.c.b16 %v1260, %v1259
      %v1288 = vpack.c.b16 %v1262, %v1261
      %v1289 = vpack.c.b16 %v1264, %v1263
      %v1290 = vpack.c.b16 %v1266, %v1265
      %v1291 = vpack.c.b16 %v1268, %v1267
      %v1292 = vpack.c.b16 %v1270, %v1269
      %v1293 = vpack.c.b16 %v1272, %v1271
      %v1294 = vpack.c.b16 %v1274, %v1273
      %v1295 = vpack.c.b16 %v1276, %v1275
      %v1296 = vpack.c.b16 %v1278, %v1277
      %v1297 = vpack.c.b16 %v1280, %v1279
      %v1298 = vpack.c.b16 %v1282, %v1281
      %v1300 = vsel %vm657, %v1218, 0
      %v1303 = vsel %vm657, %v1283, 0
      %v1306 = vsel %vm657, %v1284, 0
      %v1309 = vsel %vm657, %v1285, 0
      %v1312 = vsel %vm657, %v1286, 0
      %v1315 = vsel %vm657, %v1287, 0
      %v1318 = vsel %vm657, %v1288, 0
      %v1321 = vsel %vm657, %v1289, 0
      %v1324 = vsel %vm657, %v1290, 0
      %v1327 = vsel %vm657, %v1291, 0
      %v1330 = vsel %vm657, %v1292, 0
      %v1333 = vsel %vm657, %v1293, 0
      %v1336 = vsel %vm657, %v1294, 0
      %v1339 = vsel %vm657, %v1295, 0
      %v1342 = vsel %vm657, %v1296, 0
      %v1345 = vsel %vm657, %v1297, 0
      %v1348 = vsel %vm657, %v1298, 0
      %1350 = vmatpush.bf16.xpose.msra.mxu0 %v1324
      %1351 = vmatpush.bf16.xpose.msra.mxu0 %v1321
      %1352 = vmatpush.bf16.xpose.msra.mxu0 %v1318
      %1353 = vmatpush.bf16.xpose.msra.mxu0 %v1315
      %1354 = vmatpush.bf16.xpose.msra.mxu0 %v1312
      %1355 = vmatpush.bf16.xpose.msra.mxu0 %v1309
      %1356 = vmatpush.bf16.xpose.msra.mxu0 %v1306
      %1357 = vmatpush.bf16.xpose.msra.mxu0 %v1303
      %1358 = vmatmul.bf16.gmra.mxu0 %v1300
      %v1359 = vpop.f32.mrf.mxu0
      %v1360 = vadd.f32 0.0, %v1359
      %v1361 = vpop.f32.mrf.mxu0
      %1362 = vdwg.mxu0
      %1363 = vmatpush.bf16.xpose.msra.mxu0 %v1348
      %1364 = vmatpush.bf16.xpose.msra.mxu0 %v1345
      %1365 = vmatpush.bf16.xpose.msra.mxu0 %v1342
      %1366 = vmatpush.bf16.xpose.msra.mxu0 %v1339
      %1367 = vmatpush.bf16.xpose.msra.mxu0 %v1336
      %1368 = vmatpush.bf16.xpose.msra.mxu0 %v1333
      %1369 = vmatpush.bf16.xpose.msra.mxu0 %v1330
      %1370 = vmatpush.bf16.xpose.msra.mxu0 %v1327
      %1371 = vmatmul.bf16.gmra.mxu0 %v1300
      %v1372 = vpop.f32.mrf.mxu0
      %v1373 = vadd.f32 0.0, %v1372
      %v1374 = vpop.f32.mrf.mxu0
      %1375 = vdwg.mxu0
      %v1376 = vadd.f32 %v1182, %v1360
      %v1377 = vadd.f32 %v1183, %v1373
      %v1378 = vld [vmem:[%s1184] sm:$0xf]
      %v1379 = vld [vmem:[%s1184 + $0x4] sm:$0xf]
      %v1380 = vld [vmem:[%s1184 + $0x8] sm:$0x1]
      %v1381 = vld [vmem:[%s1184 + $0xc] sm:$0xf]
      %v1382 = vld [vmem:[%s1184 + $0x10] sm:$0xf]
      %v1383 = vld [vmem:[%s1184 + $0x14] sm:$0x1]
      %v1384 = vld [vmem:[%s1184 + $0x18] sm:$0xf]
      %v1385 = vld [vmem:[%s1184 + $0x1c] sm:$0xf]
      %v1386 = vld [vmem:[%s1184 + $0x20] sm:$0x1]
      %v1387 = vld [vmem:[%s1184 + $0x24] sm:$0xf]
      %v1388 = vld [vmem:[%s1184 + $0x28] sm:$0xf]
      %v1389 = vld [vmem:[%s1184 + $0x2c] sm:$0x1]
      %v1390 = vld [vmem:[%s1184 + $0x30] sm:$0xf]
      %v1391 = vld [vmem:[%s1184 + $0x34] sm:$0xf]
      %v1392 = vld [vmem:[%s1184 + $0x38] sm:$0x1]
      %v1393 = vld [vmem:[%s1184 + $0x3c] sm:$0xf]
      %v1394 = vld [vmem:[%s1184 + $0x40] sm:$0xf]
      %v1395 = vld [vmem:[%s1184 + $0x44] sm:$0x1]
      %v1396 = vld [vmem:[%s1184 + $0x48] sm:$0xf]
      %v1397 = vld [vmem:[%s1184 + $0x4c] sm:$0xf]
      %v1398 = vld [vmem:[%s1184 + $0x50] sm:$0x1]
      %v1399 = vld [vmem:[%s1184 + $0x54] sm:$0xf]
      %v1400 = vld [vmem:[%s1184 + $0x58] sm:$0xf]
      %v1401 = vld [vmem:[%s1184 + $0x5c] sm:$0x1]
      %v1402 = vld [vmem:[%s1184 + $0x60] sm:$0xf]
      %v1403 = vld [vmem:[%s1184 + $0x64] sm:$0xf]
      %v1404 = vld [vmem:[%s1184 + $0x68] sm:$0x1]
      %v1405 = vld [vmem:[%s1184 + $0x6c] sm:$0xf]
      %v1406 = vld [vmem:[%s1184 + $0x70] sm:$0xf]
      %v1407 = vld [vmem:[%s1184 + $0x74] sm:$0x1]
      %v1408 = vld [vmem:[%s1184 + $0x78] sm:$0xf]
      %v1409 = vld [vmem:[%s1184 + $0x7c] sm:$0xf]
      %v1410 = vld [vmem:[%s1184 + $0x80] sm:$0x1]
      %v1411 = vld [vmem:[%s1184 + $0x84] sm:$0xf]
      %v1412 = vld [vmem:[%s1184 + $0x88] sm:$0xf]
      %v1413 = vld [vmem:[%s1184 + $0x8c] sm:$0x1]
      %v1414 = vld [vmem:[%s1184 + $0x90] sm:$0xf]
      %v1415 = vld [vmem:[%s1184 + $0x94] sm:$0xf]
      %v1416 = vld [vmem:[%s1184 + $0x98] sm:$0x1]
      %v1417 = vld [vmem:[%s1184 + $0x9c] sm:$0xf]
      %v1418 = vld [vmem:[%s1184 + $0xa0] sm:$0xf]
      %v1419 = vld [vmem:[%s1184 + $0xa4] sm:$0x1]
      %v1420 = vld [vmem:[%s1184 + $0xa8] sm:$0xf]
      %v1421 = vld [vmem:[%s1184 + $0xac] sm:$0xf]
      %v1422 = vld [vmem:[%s1184 + $0xb0] sm:$0x1]
      %v1423 = vld [vmem:[%s1184 + $0xb4] sm:$0xf]
      %v1424 = vld [vmem:[%s1184 + $0xb8] sm:$0xf]
      %v1425 = vld [vmem:[%s1184 + $0xbc] sm:$0x1]
      %v1427 = vshrl.u32 %v1378, 16
      %v1429 = vrot.slane %v1427, 4
      %v1430 = vshll.u32 %v1378, 16
      %v1432 = vrot.slane %v1430, 5
      %v1433 = vor.u32 %v1429, %v1432
      %v1434 = vrot.slane %v1433, 4
      %v1436 = vshll.u32 %v1379, 16
      %v1438 = vrot.slane %v1436, 5
      %v1439 = vsel %vm222, %v1434, %v1438
      %v1440 = vshrl.u32 %v1379, 16
      %v1442 = vrot.slane %v1440, 4
      %v1443 = vor.u32 %v1442, %v1438
      %v1444 = vrot.slane %v1443, 4
      %v1446 = vshll.u32 %v1380, 16
      %v1448 = vrot.slane %v1446, 5
      %v1449 = vsel %vm222, %v1444, %v1448
      %v1451 = vshrl.u32 %v1381, 16
      %v1453 = vrot.slane %v1451, 4
      %v1454 = vshll.u32 %v1381, 16
      %v1456 = vrot.slane %v1454, 5
      %v1457 = vor.u32 %v1453, %v1456
      %v1458 = vrot.slane %v1457, 4
      %v1460 = vshll.u32 %v1382, 16
      %v1462 = vrot.slane %v1460, 5
      %v1463 = vsel %vm222, %v1458, %v1462
      %v1464 = vshrl.u32 %v1382, 16
      %v1466 = vrot.slane %v1464, 4
      %v1467 = vor.u32 %v1466, %v1462
      %v1468 = vrot.slane %v1467, 4
      %v1470 = vshll.u32 %v1383, 16
      %v1472 = vrot.slane %v1470, 5
      %v1473 = vsel %vm222, %v1468, %v1472
      %v1475 = vshrl.u32 %v1384, 16
      %v1477 = vrot.slane %v1475, 4
      %v1478 = vshll.u32 %v1384, 16
      %v1480 = vrot.slane %v1478, 5
      %v1481 = vor.u32 %v1477, %v1480
      %v1482 = vrot.slane %v1481, 4
      %v1484 = vshll.u32 %v1385, 16
      %v1486 = vrot.slane %v1484, 5
      %v1487 = vsel %vm222, %v1482, %v1486
      %v1488 = vshrl.u32 %v1385, 16
      %v1490 = vrot.slane %v1488, 4
      %v1491 = vor.u32 %v1490, %v1486
      %v1492 = vrot.slane %v1491, 4
      %v1494 = vshll.u32 %v1386, 16
      %v1496 = vrot.slane %v1494, 5
      %v1497 = vsel %vm222, %v1492, %v1496
      %v1499 = vshrl.u32 %v1387, 16
      %v1501 = vrot.slane %v1499, 4
      %v1502 = vshll.u32 %v1387, 16
      %v1504 = vrot.slane %v1502, 5
      %v1505 = vor.u32 %v1501, %v1504
      %v1506 = vrot.slane %v1505, 4
      %v1508 = vshll.u32 %v1388, 16
      %v1510 = vrot.slane %v1508, 5
      %v1511 = vsel %vm222, %v1506, %v1510
      %v1512 = vshrl.u32 %v1388, 16
      %v1514 = vrot.slane %v1512, 4
      %v1515 = vor.u32 %v1514, %v1510
      %v1516 = vrot.slane %v1515, 4
      %v1518 = vshll.u32 %v1389, 16
      %v1520 = vrot.slane %v1518, 5
      %v1521 = vsel %vm222, %v1516, %v1520
      %v1523 = vshrl.u32 %v1390, 16
      %v1525 = vrot.slane %v1523, 4
      %v1526 = vshll.u32 %v1390, 16
      %v1528 = vrot.slane %v1526, 5
      %v1529 = vor.u32 %v1525, %v1528
      %v1530 = vrot.slane %v1529, 4
      %v1532 = vshll.u32 %v1391, 16
      %v1534 = vrot.slane %v1532, 5
      %v1535 = vsel %vm222, %v1530, %v1534
      %v1536 = vshrl.u32 %v1391, 16
      %v1538 = vrot.slane %v1536, 4
      %v1539 = vor.u32 %v1538, %v1534
      %v1540 = vrot.slane %v1539, 4
      %v1542 = vshll.u32 %v1392, 16
      %v1544 = vrot.slane %v1542, 5
      %v1545 = vsel %vm222, %v1540, %v1544
      %v1547 = vshrl.u32 %v1393, 16
      %v1549 = vrot.slane %v1547, 4
      %v1550 = vshll.u32 %v1393, 16
      %v1552 = vrot.slane %v1550, 5
      %v1553 = vor.u32 %v1549, %v1552
      %v1554 = vrot.slane %v1553, 4
      %v1556 = vshll.u32 %v1394, 16
      %v1558 = vrot.slane %v1556, 5
      %v1559 = vsel %vm222, %v1554, %v1558
      %v1560 = vshrl.u32 %v1394, 16
      %v1562 = vrot.slane %v1560, 4
      %v1563 = vor.u32 %v1562, %v1558
      %v1564 = vrot.slane %v1563, 4
      %v1566 = vshll.u32 %v1395, 16
      %v1568 = vrot.slane %v1566, 5
      %v1569 = vsel %vm222, %v1564, %v1568
      %v1571 = vshrl.u32 %v1396, 16
      %v1573 = vrot.slane %v1571, 4
      %v1574 = vshll.u32 %v1396, 16
      %v1576 = vrot.slane %v1574, 5
      %v1577 = vor.u32 %v1573, %v1576
      %v1578 = vrot.slane %v1577, 4
      %v1580 = vshll.u32 %v1397, 16
      %v1582 = vrot.slane %v1580, 5
      %v1583 = vsel %vm222, %v1578, %v1582
      %v1584 = vshrl.u32 %v1397, 16
      %v1586 = vrot.slane %v1584, 4
      %v1587 = vor.u32 %v1586, %v1582
      %v1588 = vrot.slane %v1587, 4
      %v1590 = vshll.u32 %v1398, 16
      %v1592 = vrot.slane %v1590, 5
      %v1593 = vsel %vm222, %v1588, %v1592
      %v1595 = vshrl.u32 %v1399, 16
      %v1597 = vrot.slane %v1595, 4
      %v1598 = vshll.u32 %v1399, 16
      %v1600 = vrot.slane %v1598, 5
      %v1601 = vor.u32 %v1597, %v1600
      %v1602 = vrot.slane %v1601, 4
      %v1604 = vshll.u32 %v1400, 16
      %v1606 = vrot.slane %v1604, 5
      %v1607 = vsel %vm222, %v1602, %v1606
      %v1608 = vshrl.u32 %v1400, 16
      %v1610 = vrot.slane %v1608, 4
      %v1611 = vor.u32 %v1610, %v1606
      %v1612 = vrot.slane %v1611, 4
      %v1614 = vshll.u32 %v1401, 16
      %v1616 = vrot.slane %v1614, 5
      %v1617 = vsel %vm222, %v1612, %v1616
      %v1619 = vshrl.u32 %v1402, 16
      %v1621 = vrot.slane %v1619, 4
      %v1622 = vshll.u32 %v1402, 16
      %v1624 = vrot.slane %v1622, 5
      %v1625 = vor.u32 %v1621, %v1624
      %v1626 = vrot.slane %v1625, 4
      %v1628 = vshll.u32 %v1403, 16
      %v1630 = vrot.slane %v1628, 5
      %v1631 = vsel %vm222, %v1626, %v1630
      %v1632 = vshrl.u32 %v1403, 16
      %v1634 = vrot.slane %v1632, 4
      %v1635 = vor.u32 %v1634, %v1630
      %v1636 = vrot.slane %v1635, 4
      %v1638 = vshll.u32 %v1404, 16
      %v1640 = vrot.slane %v1638, 5
      %v1641 = vsel %vm222, %v1636, %v1640
      %v1643 = vshrl.u32 %v1405, 16
      %v1645 = vrot.slane %v1643, 4
      %v1646 = vshll.u32 %v1405, 16
      %v1648 = vrot.slane %v1646, 5
      %v1649 = vor.u32 %v1645, %v1648
      %v1650 = vrot.slane %v1649, 4
      %v1652 = vshll.u32 %v1406, 16
      %v1654 = vrot.slane %v1652, 5
      %v1655 = vsel %vm222, %v1650, %v1654
      %v1656 = vshrl.u32 %v1406, 16
      %v1658 = vrot.slane %v1656, 4
      %v1659 = vor.u32 %v1658, %v1654
      %v1660 = vrot.slane %v1659, 4
      %v1662 = vshll.u32 %v1407, 16
      %v1664 = vrot.slane %v1662, 5
      %v1665 = vsel %vm222, %v1660, %v1664
      %v1667 = vshrl.u32 %v1408, 16
      %v1669 = vrot.slane %v1667, 4
      %v1670 = vshll.u32 %v1408, 16
      %v1672 = vrot.slane %v1670, 5
      %v1673 = vor.u32 %v1669, %v1672
      %v1674 = vrot.slane %v1673, 4
      %v1676 = vshll.u32 %v1409, 16
      %v1678 = vrot.slane %v1676, 5
      %v1679 = vsel %vm222, %v1674, %v1678
      %v1680 = vshrl.u32 %v1409, 16
      %v1682 = vrot.slane %v1680, 4
      %v1683 = vor.u32 %v1682, %v1678
      %v1684 = vrot.slane %v1683, 4
      %v1686 = vshll.u32 %v1410, 16
      %v1688 = vrot.slane %v1686, 5
      %v1689 = vsel %vm222, %v1684, %v1688
      %v1691 = vshrl.u32 %v1411, 16
      %v1693 = vrot.slane %v1691, 4
      %v1694 = vshll.u32 %v1411, 16
      %v1696 = vrot.slane %v1694, 5
      %v1697 = vor.u32 %v1693, %v1696
      %v1698 = vrot.slane %v1697, 4
      %v1700 = vshll.u32 %v1412, 16
      %v1702 = vrot.slane %v1700, 5
      %v1703 = vsel %vm222, %v1698, %v1702
      %v1704 = vshrl.u32 %v1412, 16
      %v1706 = vrot.slane %v1704, 4
      %v1707 = vor.u32 %v1706, %v1702
      %v1708 = vrot.slane %v1707, 4
      %v1710 = vshll.u32 %v1413, 16
      %v1712 = vrot.slane %v1710, 5
      %v1713 = vsel %vm222, %v1708, %v1712
      %v1715 = vshrl.u32 %v1414, 16
      %v1717 = vrot.slane %v1715, 4
      %v1718 = vshll.u32 %v1414, 16
      %v1720 = vrot.slane %v1718, 5
      %v1721 = vor.u32 %v1717, %v1720
      %v1722 = vrot.slane %v1721, 4
      %v1724 = vshll.u32 %v1415, 16
      %v1726 = vrot.slane %v1724, 5
      %v1727 = vsel %vm222, %v1722, %v1726
      %v1728 = vshrl.u32 %v1415, 16
      %v1730 = vrot.slane %v1728, 4
      %v1731 = vor.u32 %v1730, %v1726
      %v1732 = vrot.slane %v1731, 4
      %v1734 = vshll.u32 %v1416, 16
      %v1736 = vrot.slane %v1734, 5
      %v1737 = vsel %vm222, %v1732, %v1736
      %v1739 = vshrl.u32 %v1417, 16
      %v1741 = vrot.slane %v1739, 4
      %v1742 = vshll.u32 %v1417, 16
      %v1744 = vrot.slane %v1742, 5
      %v1745 = vor.u32 %v1741, %v1744
      %v1746 = vrot.slane %v1745, 4
      %v1748 = vshll.u32 %v1418, 16
      %v1750 = vrot.slane %v1748, 5
      %v1751 = vsel %vm222, %v1746, %v1750
      %v1752 = vshrl.u32 %v1418, 16
      %v1754 = vrot.slane %v1752, 4
      %v1755 = vor.u32 %v1754, %v1750
      %v1756 = vrot.slane %v1755, 4
      %v1758 = vshll.u32 %v1419, 16
      %v1760 = vrot.slane %v1758, 5
      %v1761 = vsel %vm222, %v1756, %v1760
      %v1763 = vshrl.u32 %v1420, 16
      %v1765 = vrot.slane %v1763, 4
      %v1766 = vshll.u32 %v1420, 16
      %v1768 = vrot.slane %v1766, 5
      %v1769 = vor.u32 %v1765, %v1768
      %v1770 = vrot.slane %v1769, 4
      %v1772 = vshll.u32 %v1421, 16
      %v1774 = vrot.slane %v1772, 5
      %v1775 = vsel %vm222, %v1770, %v1774
      %v1776 = vshrl.u32 %v1421, 16
      %v1778 = vrot.slane %v1776, 4
      %v1779 = vor.u32 %v1778, %v1774
      %v1780 = vrot.slane %v1779, 4
      %v1782 = vshll.u32 %v1422, 16
      %v1784 = vrot.slane %v1782, 5
      %v1785 = vsel %vm222, %v1780, %v1784
      %v1787 = vshrl.u32 %v1423, 16
      %v1789 = vrot.slane %v1787, 4
      %v1790 = vshll.u32 %v1423, 16
      %v1792 = vrot.slane %v1790, 5
      %v1793 = vor.u32 %v1789, %v1792
      %v1794 = vrot.slane %v1793, 4
      %v1796 = vshll.u32 %v1424, 16
      %v1798 = vrot.slane %v1796, 5
      %v1799 = vsel %vm222, %v1794, %v1798
      %v1800 = vshrl.u32 %v1424, 16
      %v1802 = vrot.slane %v1800, 4
      %v1803 = vor.u32 %v1802, %v1798
      %v1804 = vrot.slane %v1803, 4
      %v1806 = vshll.u32 %v1425, 16
      %v1808 = vrot.slane %v1806, 5
      %v1809 = vsel %vm222, %v1804, %v1808
      %s1810 = scalar_lea.vmem %s1, 16
      %v1811 = vld [vmem:[%s1810] sm:$0xf]
      %v1812 = vunpack.c.l.b16 %v1439
      %v1813 = vunpack.c.l.b16 %v1449
      %v1814 = vunpack.c.l.b16 %v1463
      %v1815 = vunpack.c.l.b16 %v1473
      %v1816 = vunpack.c.l.b16 %v1487
      %v1817 = vunpack.c.l.b16 %v1497
      %v1818 = vunpack.c.l.b16 %v1511
      %v1819 = vunpack.c.l.b16 %v1521
      %v1820 = vunpack.c.l.b16 %v1535
      %v1821 = vunpack.c.l.b16 %v1545
      %v1822 = vunpack.c.l.b16 %v1559
      %v1823 = vunpack.c.l.b16 %v1569
      %v1824 = vunpack.c.l.b16 %v1583
      %v1825 = vunpack.c.l.b16 %v1593
      %v1826 = vunpack.c.l.b16 %v1607
      %v1827 = vunpack.c.l.b16 %v1617
      %v1828 = vunpack.c.l.b16 %v1631
      %v1829 = vunpack.c.l.b16 %v1641
      %v1830 = vunpack.c.l.b16 %v1655
      %v1831 = vunpack.c.l.b16 %v1665
      %v1832 = vunpack.c.l.b16 %v1679
      %v1833 = vunpack.c.l.b16 %v1689
      %v1834 = vunpack.c.l.b16 %v1703
      %v1835 = vunpack.c.l.b16 %v1713
      %v1836 = vunpack.c.l.b16 %v1727
      %v1837 = vunpack.c.l.b16 %v1737
      %v1838 = vunpack.c.l.b16 %v1751
      %v1839 = vunpack.c.l.b16 %v1761
      %v1840 = vunpack.c.l.b16 %v1775
      %v1841 = vunpack.c.l.b16 %v1785
      %v1842 = vunpack.c.l.b16 %v1799
      %v1843 = vunpack.c.l.b16 %v1809
      %v1844 = vpack.c.b16 %v1813, %v1812
      %v1845 = vpack.c.b16 %v1815, %v1814
      %v1846 = vpack.c.b16 %v1817, %v1816
      %v1847 = vpack.c.b16 %v1819, %v1818
      %v1848 = vpack.c.b16 %v1821, %v1820
      %v1849 = vpack.c.b16 %v1823, %v1822
      %v1850 = vpack.c.b16 %v1825, %v1824
      %v1851 = vpack.c.b16 %v1827, %v1826
      %v1852 = vpack.c.b16 %v1829, %v1828
      %v1853 = vpack.c.b16 %v1831, %v1830
      %v1854 = vpack.c.b16 %v1833, %v1832
      %v1855 = vpack.c.b16 %v1835, %v1834
      %v1856 = vpack.c.b16 %v1837, %v1836
      %v1857 = vpack.c.b16 %v1839, %v1838
      %v1858 = vpack.c.b16 %v1841, %v1840
      %v1859 = vpack.c.b16 %v1843, %v1842
      %v1861 = vsel %vm657, %v1811, 0
      %v1864 = vsel %vm657, %v1844, 0
      %v1867 = vsel %vm657, %v1845, 0
      %v1870 = vsel %vm657, %v1846, 0
      %v1873 = vsel %vm657, %v1847, 0
      %v1876 = vsel %vm657, %v1848, 0
      %v1879 = vsel %vm657, %v1849, 0
      %v1882 = vsel %vm657, %v1850, 0
      %v1885 = vsel %vm657, %v1851, 0
      %v1888 = vsel %vm657, %v1852, 0
      %v1891 = vsel %vm657, %v1853, 0
      %v1894 = vsel %vm657, %v1854, 0
      %v1897 = vsel %vm657, %v1855, 0
      %v1900 = vsel %vm657, %v1856, 0
      %v1903 = vsel %vm657, %v1857, 0
      %v1906 = vsel %vm657, %v1858, 0
      %v1909 = vsel %vm657, %v1859, 0
      %1911 = vmatpush.bf16.xpose.msra.mxu0 %v1885
      %1912 = vmatpush.bf16.xpose.msra.mxu0 %v1882
      %1913 = vmatpush.bf16.xpose.msra.mxu0 %v1879
      %1914 = vmatpush.bf16.xpose.msra.mxu0 %v1876
      %1915 = vmatpush.bf16.xpose.msra.mxu0 %v1873
      %1916 = vmatpush.bf16.xpose.msra.mxu0 %v1870
      %1917 = vmatpush.bf16.xpose.msra.mxu0 %v1867
      %1918 = vmatpush.bf16.xpose.msra.mxu0 %v1864
      %1919 = vmatmul.bf16.gmra.mxu0 %v1861
      %v1920 = vpop.f32.mrf.mxu0
      %v1921 = vadd.f32 0.0, %v1920
      %v1922 = vpop.f32.mrf.mxu0
      %1923 = vdwg.mxu0
      %1924 = vmatpush.bf16.xpose.msra.mxu0 %v1909
      %1925 = vmatpush.bf16.xpose.msra.mxu0 %v1906
      %1926 = vmatpush.bf16.xpose.msra.mxu0 %v1903
      %1927 = vmatpush.bf16.xpose.msra.mxu0 %v1900
      %1928 = vmatpush.bf16.xpose.msra.mxu0 %v1897
      %1929 = vmatpush.bf16.xpose.msra.mxu0 %v1894
      %1930 = vmatpush.bf16.xpose.msra.mxu0 %v1891
      %1931 = vmatpush.bf16.xpose.msra.mxu0 %v1888
      %1932 = vmatmul.bf16.gmra.mxu0 %v1861
      %v1933 = vpop.f32.mrf.mxu0
      %v1934 = vadd.f32 0.0, %v1933
      %v1935 = vpop.f32.mrf.mxu0
      %1936 = vdwg.mxu0
      %v1937 = vadd.f32 %v1376, %v1921
      %v1938 = vadd.f32 %v1377, %v1934
      %v1939 = vld [vmem:[%s1184] sm:$0xe]
      %v1940 = vld [vmem:[%s1184 + $0xc] sm:$0xe]
      %v1941 = vld [vmem:[%s1184 + $0x18] sm:$0xe]
      %v1942 = vld [vmem:[%s1184 + $0x24] sm:$0xe]
      %v1943 = vld [vmem:[%s1184 + $0x30] sm:$0xe]
      %v1944 = vld [vmem:[%s1184 + $0x3c] sm:$0xe]
      %v1945 = vld [vmem:[%s1184 + $0x48] sm:$0xe]
      %v1946 = vld [vmem:[%s1184 + $0x54] sm:$0xe]
      %v1947 = vld [vmem:[%s1184 + $0x60] sm:$0xe]
      %v1948 = vld [vmem:[%s1184 + $0x6c] sm:$0xe]
      %v1949 = vld [vmem:[%s1184 + $0x78] sm:$0xe]
      %v1950 = vld [vmem:[%s1184 + $0x84] sm:$0xe]
      %v1951 = vld [vmem:[%s1184 + $0x90] sm:$0xe]
      %v1952 = vld [vmem:[%s1184 + $0x9c] sm:$0xe]
      %v1953 = vld [vmem:[%s1184 + $0xa8] sm:$0xe]
      %v1954 = vld [vmem:[%s1184 + $0xb4] sm:$0xe]
      %v2003 = vrot.slane %v1939, 5
      %v2004 = vrot.slane %v2003, 4
      %v2005 = vrot.slane %v1379, 5
      %v2006 = vsel %vm942, %v2004, %v2005
      %v2007 = vrot.slane %v2005, 4
      %v2008 = vrot.slane %v1380, 5
      %v2009 = vsel %vm942, %v2007, %v2008
      %v2010 = vrot.slane %v1940, 5
      %v2011 = vrot.slane %v2010, 4
      %v2012 = vrot.slane %v1382, 5
      %v2013 = vsel %vm942, %v2011, %v2012
      %v2014 = vrot.slane %v2012, 4
      %v2015 = vrot.slane %v1383, 5
      %v2016 = vsel %vm942, %v2014, %v2015
      %v2017 = vrot.slane %v1941, 5
      %v2018 = vrot.slane %v2017, 4
      %v2019 = vrot.slane %v1385, 5
      %v2020 = vsel %vm942, %v2018, %v2019
      %v2021 = vrot.slane %v2019, 4
      %v2022 = vrot.slane %v1386, 5
      %v2023 = vsel %vm942, %v2021, %v2022
      %v2024 = vrot.slane %v1942, 5
      %v2025 = vrot.slane %v2024, 4
      %v2026 = vrot.slane %v1388, 5
      %v2027 = vsel %vm942, %v2025, %v2026
      %v2028 = vrot.slane %v2026, 4
      %v2029 = vrot.slane %v1389, 5
      %v2030 = vsel %vm942, %v2028, %v2029
      %v2031 = vrot.slane %v1943, 5
      %v2032 = vrot.slane %v2031, 4
      %v2033 = vrot.slane %v1391, 5
      %v2034 = vsel %vm942, %v2032, %v2033
      %v2035 = vrot.slane %v2033, 4
      %v2036 = vrot.slane %v1392, 5
      %v2037 = vsel %vm942, %v2035, %v2036
      %v2038 = vrot.slane %v1944, 5
      %v2039 = vrot.slane %v2038, 4
      %v2040 = vrot.slane %v1394, 5
      %v2041 = vsel %vm942, %v2039, %v2040
      %v2042 = vrot.slane %v2040, 4
      %v2043 = vrot.slane %v1395, 5
      %v2044 = vsel %vm942, %v2042, %v2043
      %v2045 = vrot.slane %v1945, 5
      %v2046 = vrot.slane %v2045, 4
      %v2047 = vrot.slane %v1397, 5
      %v2048 = vsel %vm942, %v2046, %v2047
      %v2049 = vrot.slane %v2047, 4
      %v2050 = vrot.slane %v1398, 5
      %v2051 = vsel %vm942, %v2049, %v2050
      %v2052 = vrot.slane %v1946, 5
      %v2053 = vrot.slane %v2052, 4
      %v2054 = vrot.slane %v1400, 5
      %v2055 = vsel %vm942, %v2053, %v2054
      %v2056 = vrot.slane %v2054, 4
      %v2057 = vrot.slane %v1401, 5
      %v2058 = vsel %vm942, %v2056, %v2057
      %v2059 = vrot.slane %v1947, 5
      %v2060 = vrot.slane %v2059, 4
      %v2061 = vrot.slane %v1403, 5
      %v2062 = vsel %vm942, %v2060, %v2061
      %v2063 = vrot.slane %v2061, 4
      %v2064 = vrot.slane %v1404, 5
      %v2065 = vsel %vm942, %v2063, %v2064
      %v2066 = vrot.slane %v1948, 5
      %v2067 = vrot.slane %v2066, 4
      %v2068 = vrot.slane %v1406, 5
      %v2069 = vsel %vm942, %v2067, %v2068
      %v2070 = vrot.slane %v2068, 4
      %v2071 = vrot.slane %v1407, 5
      %v2072 = vsel %vm942, %v2070, %v2071
      %v2073 = vrot.slane %v1949, 5
      %v2074 = vrot.slane %v2073, 4
      %v2075 = vrot.slane %v1409, 5
      %v2076 = vsel %vm942, %v2074, %v2075
      %v2077 = vrot.slane %v2075, 4
      %v2078 = vrot.slane %v1410, 5
      %v2079 = vsel %vm942, %v2077, %v2078
      %v2080 = vrot.slane %v1950, 5
      %v2081 = vrot.slane %v2080, 4
      %v2082 = vrot.slane %v1412, 5
      %v2083 = vsel %vm942, %v2081, %v2082
      %v2084 = vrot.slane %v2082, 4
      %v2085 = vrot.slane %v1413, 5
      %v2086 = vsel %vm942, %v2084, %v2085
      %v2087 = vrot.slane %v1951, 5
      %v2088 = vrot.slane %v2087, 4
      %v2089 = vrot.slane %v1415, 5
      %v2090 = vsel %vm942, %v2088, %v2089
      %v2091 = vrot.slane %v2089, 4
      %v2092 = vrot.slane %v1416, 5
      %v2093 = vsel %vm942, %v2091, %v2092
      %v2094 = vrot.slane %v1952, 5
      %v2095 = vrot.slane %v2094, 4
      %v2096 = vrot.slane %v1418, 5
      %v2097 = vsel %vm942, %v2095, %v2096
      %v2098 = vrot.slane %v2096, 4
      %v2099 = vrot.slane %v1419, 5
      %v2100 = vsel %vm942, %v2098, %v2099
      %v2101 = vrot.slane %v1953, 5
      %v2102 = vrot.slane %v2101, 4
      %v2103 = vrot.slane %v1421, 5
      %v2104 = vsel %vm942, %v2102, %v2103
      %v2105 = vrot.slane %v2103, 4
      %v2106 = vrot.slane %v1422, 5
      %v2107 = vsel %vm942, %v2105, %v2106
      %v2108 = vrot.slane %v1954, 5
      %v2109 = vrot.slane %v2108, 4
      %v2110 = vrot.slane %v1424, 5
      %v2111 = vsel %vm942, %v2109, %v2110
      %v2112 = vrot.slane %v2110, 4
      %v2113 = vrot.slane %v1425, 5
      %v2114 = vsel %vm942, %v2112, %v2113
      %s2115 = scalar_lea.vmem %s1, 20
      %v2116 = vld [vmem:[%s2115] sm:$0xf]
      %v2117 = vunpack.c.l.b16 %v2006
      %v2118 = vunpack.c.l.b16 %v2009
      %v2119 = vunpack.c.l.b16 %v2013
      %v2120 = vunpack.c.l.b16 %v2016
      %v2121 = vunpack.c.l.b16 %v2020
      %v2122 = vunpack.c.l.b16 %v2023
      %v2123 = vunpack.c.l.b16 %v2027
      %v2124 = vunpack.c.l.b16 %v2030
      %v2125 = vunpack.c.l.b16 %v2034
      %v2126 = vunpack.c.l.b16 %v2037
      %v2127 = vunpack.c.l.b16 %v2041
      %v2128 = vunpack.c.l.b16 %v2044
      %v2129 = vunpack.c.l.b16 %v2048
      %v2130 = vunpack.c.l.b16 %v2051
      %v2131 = vunpack.c.l.b16 %v2055
      %v2132 = vunpack.c.l.b16 %v2058
      %v2133 = vunpack.c.l.b16 %v2062
      %v2134 = vunpack.c.l.b16 %v2065
      %v2135 = vunpack.c.l.b16 %v2069
      %v2136 = vunpack.c.l.b16 %v2072
      %v2137 = vunpack.c.l.b16 %v2076
      %v2138 = vunpack.c.l.b16 %v2079
      %v2139 = vunpack.c.l.b16 %v2083
      %v2140 = vunpack.c.l.b16 %v2086
      %v2141 = vunpack.c.l.b16 %v2090
      %v2142 = vunpack.c.l.b16 %v2093
      %v2143 = vunpack.c.l.b16 %v2097
      %v2144 = vunpack.c.l.b16 %v2100
      %v2145 = vunpack.c.l.b16 %v2104
      %v2146 = vunpack.c.l.b16 %v2107
      %v2147 = vunpack.c.l.b16 %v2111
      %v2148 = vunpack.c.l.b16 %v2114
      %v2149 = vpack.c.b16 %v2118, %v2117
      %v2150 = vpack.c.b16 %v2120, %v2119
      %v2151 = vpack.c.b16 %v2122, %v2121
      %v2152 = vpack.c.b16 %v2124, %v2123
      %v2153 = vpack.c.b16 %v2126, %v2125
      %v2154 = vpack.c.b16 %v2128, %v2127
      %v2155 = vpack.c.b16 %v2130, %v2129
      %v2156 = vpack.c.b16 %v2132, %v2131
      %v2157 = vpack.c.b16 %v2134, %v2133
      %v2158 = vpack.c.b16 %v2136, %v2135
      %v2159 = vpack.c.b16 %v2138, %v2137
      %v2160 = vpack.c.b16 %v2140, %v2139
      %v2161 = vpack.c.b16 %v2142, %v2141
      %v2162 = vpack.c.b16 %v2144, %v2143
      %v2163 = vpack.c.b16 %v2146, %v2145
      %v2164 = vpack.c.b16 %v2148, %v2147
      %v2166 = vsel %vm657, %v2116, 0
      %v2169 = vsel %vm657, %v2149, 0
      %v2172 = vsel %vm657, %v2150, 0
      %v2175 = vsel %vm657, %v2151, 0
      %v2178 = vsel %vm657, %v2152, 0
      %v2181 = vsel %vm657, %v2153, 0
      %v2184 = vsel %vm657, %v2154, 0
      %v2187 = vsel %vm657, %v2155, 0
      %v2190 = vsel %vm657, %v2156, 0
      %v2193 = vsel %vm657, %v2157, 0
      %v2196 = vsel %vm657, %v2158, 0
      %v2199 = vsel %vm657, %v2159, 0
      %v2202 = vsel %vm657, %v2160, 0
      %v2205 = vsel %vm657, %v2161, 0
      %v2208 = vsel %vm657, %v2162, 0
      %v2211 = vsel %vm657, %v2163, 0
      %v2214 = vsel %vm657, %v2164, 0
      %2216 = vmatpush.bf16.xpose.msra.mxu0 %v2190
      %2217 = vmatpush.bf16.xpose.msra.mxu0 %v2187
      %2218 = vmatpush.bf16.xpose.msra.mxu0 %v2184
      %2219 = vmatpush.bf16.xpose.msra.mxu0 %v2181
      %2220 = vmatpush.bf16.xpose.msra.mxu0 %v2178
      %2221 = vmatpush.bf16.xpose.msra.mxu0 %v2175
      %2222 = vmatpush.bf16.xpose.msra.mxu0 %v2172
      %2223 = vmatpush.bf16.xpose.msra.mxu0 %v2169
      %2224 = vmatmul.bf16.gmra.mxu0 %v2166
      %v2225 = vpop.f32.mrf.mxu0
      %v2226 = vadd.f32 0.0, %v2225
      %v2227 = vpop.f32.mrf.mxu0
      %2228 = vdwg.mxu0
      %2229 = vmatpush.bf16.xpose.msra.mxu0 %v2214
      %2230 = vmatpush.bf16.xpose.msra.mxu0 %v2211
      %2231 = vmatpush.bf16.xpose.msra.mxu0 %v2208
      %2232 = vmatpush.bf16.xpose.msra.mxu0 %v2205
      %2233 = vmatpush.bf16.xpose.msra.mxu0 %v2202
      %2234 = vmatpush.bf16.xpose.msra.mxu0 %v2199
      %2235 = vmatpush.bf16.xpose.msra.mxu0 %v2196
      %2236 = vmatpush.bf16.xpose.msra.mxu0 %v2193
      %2237 = vmatmul.bf16.gmra.mxu0 %v2166
      %v2238 = vpop.f32.mrf.mxu0
      %v2239 = vadd.f32 0.0, %v2238
      %v2240 = vpop.f32.mrf.mxu0
      %2241 = vdwg.mxu0
      %v2242 = vadd.f32 %v1937, %v2226
      %v2243 = vadd.f32 %v1938, %v2239
      %s2244 = scalar_lea.vmem %s165, 24
      %v2245 = vld [vmem:[%s2244] sm:$0xf]
      %v2246 = vld [vmem:[%s2244 + $0x4] sm:$0xf]
      %v2247 = vld [vmem:[%s2244 + $0xc] sm:$0xf]
      %v2248 = vld [vmem:[%s2244 + $0x10] sm:$0xf]
      %v2249 = vld [vmem:[%s2244 + $0x18] sm:$0xf]
      %v2250 = vld [vmem:[%s2244 + $0x1c] sm:$0xf]
      %v2251 = vld [vmem:[%s2244 + $0x24] sm:$0xf]
      %v2252 = vld [vmem:[%s2244 + $0x28] sm:$0xf]
      %v2253 = vld [vmem:[%s2244 + $0x30] sm:$0xf]
      %v2254 = vld [vmem:[%s2244 + $0x34] sm:$0xf]
      %v2255 = vld [vmem:[%s2244 + $0x3c] sm:$0xf]
      %v2256 = vld [vmem:[%s2244 + $0x40] sm:$0xf]
      %v2257 = vld [vmem:[%s2244 + $0x48] sm:$0xf]
      %v2258 = vld [vmem:[%s2244 + $0x4c] sm:$0xf]
      %v2259 = vld [vmem:[%s2244 + $0x54] sm:$0xf]
      %v2260 = vld [vmem:[%s2244 + $0x58] sm:$0xf]
      %v2261 = vld [vmem:[%s2244 + $0x60] sm:$0xf]
      %v2262 = vld [vmem:[%s2244 + $0x64] sm:$0xf]
      %v2263 = vld [vmem:[%s2244 + $0x6c] sm:$0xf]
      %v2264 = vld [vmem:[%s2244 + $0x70] sm:$0xf]
      %v2265 = vld [vmem:[%s2244 + $0x78] sm:$0xf]
      %v2266 = vld [vmem:[%s2244 + $0x7c] sm:$0xf]
      %v2267 = vld [vmem:[%s2244 + $0x84] sm:$0xf]
      %v2268 = vld [vmem:[%s2244 + $0x88] sm:$0xf]
      %v2269 = vld [vmem:[%s2244 + $0x90] sm:$0xf]
      %v2270 = vld [vmem:[%s2244 + $0x94] sm:$0xf]
      %v2271 = vld [vmem:[%s2244 + $0x9c] sm:$0xf]
      %v2272 = vld [vmem:[%s2244 + $0xa0] sm:$0xf]
      %v2273 = vld [vmem:[%s2244 + $0xa8] sm:$0xf]
      %v2274 = vld [vmem:[%s2244 + $0xac] sm:$0xf]
      %v2275 = vld [vmem:[%s2244 + $0xb4] sm:$0xf]
      %v2276 = vld [vmem:[%s2244 + $0xb8] sm:$0xf]
      %s2277 = scalar_lea.vmem %s1, 24
      %v2278 = vld [vmem:[%s2277] sm:$0xf]
      %v2311 = vunpack.c.l.b16 %v2245
      %v2312 = vunpack.c.l.b16 %v2246
      %v2313 = vunpack.c.l.b16 %v2247
      %v2314 = vunpack.c.l.b16 %v2248
      %v2315 = vunpack.c.l.b16 %v2249
      %v2316 = vunpack.c.l.b16 %v2250
      %v2317 = vunpack.c.l.b16 %v2251
      %v2318 = vunpack.c.l.b16 %v2252
      %v2319 = vunpack.c.l.b16 %v2253
      %v2320 = vunpack.c.l.b16 %v2254
      %v2321 = vunpack.c.l.b16 %v2255
      %v2322 = vunpack.c.l.b16 %v2256
      %v2323 = vunpack.c.l.b16 %v2257
      %v2324 = vunpack.c.l.b16 %v2258
      %v2325 = vunpack.c.l.b16 %v2259
      %v2326 = vunpack.c.l.b16 %v2260
      %v2327 = vunpack.c.l.b16 %v2261
      %v2328 = vunpack.c.l.b16 %v2262
      %v2329 = vunpack.c.l.b16 %v2263
      %v2330 = vunpack.c.l.b16 %v2264
      %v2331 = vunpack.c.l.b16 %v2265
      %v2332 = vunpack.c.l.b16 %v2266
      %v2333 = vunpack.c.l.b16 %v2267
      %v2334 = vunpack.c.l.b16 %v2268
      %v2335 = vunpack.c.l.b16 %v2269
      %v2336 = vunpack.c.l.b16 %v2270
      %v2337 = vunpack.c.l.b16 %v2271
      %v2338 = vunpack.c.l.b16 %v2272
      %v2339 = vunpack.c.l.b16 %v2273
      %v2340 = vunpack.c.l.b16 %v2274
      %v2341 = vunpack.c.l.b16 %v2275
      %v2342 = vunpack.c.l.b16 %v2276
      %v2343 = vpack.c.b16 %v2312, %v2311
      %v2344 = vpack.c.b16 %v2314, %v2313
      %v2345 = vpack.c.b16 %v2316, %v2315
      %v2346 = vpack.c.b16 %v2318, %v2317
      %v2347 = vpack.c.b16 %v2320, %v2319
      %v2348 = vpack.c.b16 %v2322, %v2321
      %v2349 = vpack.c.b16 %v2324, %v2323
      %v2350 = vpack.c.b16 %v2326, %v2325
      %v2351 = vpack.c.b16 %v2328, %v2327
      %v2352 = vpack.c.b16 %v2330, %v2329
      %v2353 = vpack.c.b16 %v2332, %v2331
      %v2354 = vpack.c.b16 %v2334, %v2333
      %v2355 = vpack.c.b16 %v2336, %v2335
      %v2356 = vpack.c.b16 %v2338, %v2337
      %v2357 = vpack.c.b16 %v2340, %v2339
      %v2358 = vpack.c.b16 %v2342, %v2341
      %v2360 = vsel %vm657, %v2278, 0
      %v2363 = vsel %vm657, %v2343, 0
      %v2366 = vsel %vm657, %v2344, 0
      %v2369 = vsel %vm657, %v2345, 0
      %v2372 = vsel %vm657, %v2346, 0
      %v2375 = vsel %vm657, %v2347, 0
      %v2378 = vsel %vm657, %v2348, 0
      %v2381 = vsel %vm657, %v2349, 0
      %v2384 = vsel %vm657, %v2350, 0
      %v2387 = vsel %vm657, %v2351, 0
      %v2390 = vsel %vm657, %v2352, 0
      %v2393 = vsel %vm657, %v2353, 0
      %v2396 = vsel %vm657, %v2354, 0
      %v2399 = vsel %vm657, %v2355, 0
      %v2402 = vsel %vm657, %v2356, 0
      %v2405 = vsel %vm657, %v2357, 0
      %v2408 = vsel %vm657, %v2358, 0
      %2410 = vmatpush.bf16.xpose.msra.mxu0 %v2384
      %2411 = vmatpush.bf16.xpose.msra.mxu0 %v2381
      %2412 = vmatpush.bf16.xpose.msra.mxu0 %v2378
      %2413 = vmatpush.bf16.xpose.msra.mxu0 %v2375
      %2414 = vmatpush.bf16.xpose.msra.mxu0 %v2372
      %2415 = vmatpush.bf16.xpose.msra.mxu0 %v2369
      %2416 = vmatpush.bf16.xpose.msra.mxu0 %v2366
      %2417 = vmatpush.bf16.xpose.msra.mxu0 %v2363
      %2418 = vmatmul.bf16.gmra.mxu0 %v2360
      %v2419 = vpop.f32.mrf.mxu0
      %v2420 = vadd.f32 0.0, %v2419
      %v2421 = vpop.f32.mrf.mxu0
      %2422 = vdwg.mxu0
      %2423 = vmatpush.bf16.xpose.msra.mxu0 %v2408
      %2424 = vmatpush.bf16.xpose.msra.mxu0 %v2405
      %2425 = vmatpush.bf16.xpose.msra.mxu0 %v2402
      %2426 = vmatpush.bf16.xpose.msra.mxu0 %v2399
      %2427 = vmatpush.bf16.xpose.msra.mxu0 %v2396
      %2428 = vmatpush.bf16.xpose.msra.mxu0 %v2393
      %2429 = vmatpush.bf16.xpose.msra.mxu0 %v2390
      %2430 = vmatpush.bf16.xpose.msra.mxu0 %v2387
      %2431 = vmatmul.bf16.gmra.mxu0 %v2360
      %v2432 = vpop.f32.mrf.mxu0
      %v2433 = vadd.f32 0.0, %v2432
      %v2434 = vpop.f32.mrf.mxu0
      %2435 = vdwg.mxu0
      %v2436 = vadd.f32 %v2242, %v2420
      %v2437 = vadd.f32 %v2243, %v2433
      %v2438 = vld [vmem:[%s2244] sm:$0xf]
      %v2439 = vld [vmem:[%s2244 + $0x4] sm:$0xf]
      %v2440 = vld [vmem:[%s2244 + $0x8] sm:$0x1]
      %v2441 = vld [vmem:[%s2244 + $0xc] sm:$0xf]
      %v2442 = vld [vmem:[%s2244 + $0x10] sm:$0xf]
      %v2443 = vld [vmem:[%s2244 + $0x14] sm:$0x1]
      %v2444 = vld [vmem:[%s2244 + $0x18] sm:$0xf]
      %v2445 = vld [vmem:[%s2244 + $0x1c] sm:$0xf]
      %v2446 = vld [vmem:[%s2244 + $0x20] sm:$0x1]
      %v2447 = vld [vmem:[%s2244 + $0x24] sm:$0xf]
      %v2448 = vld [vmem:[%s2244 + $0x28] sm:$0xf]
      %v2449 = vld [vmem:[%s2244 + $0x2c] sm:$0x1]
      %v2450 = vld [vmem:[%s2244 + $0x30] sm:$0xf]
      %v2451 = vld [vmem:[%s2244 + $0x34] sm:$0xf]
      %v2452 = vld [vmem:[%s2244 + $0x38] sm:$0x1]
      %v2453 = vld [vmem:[%s2244 + $0x3c] sm:$0xf]
      %v2454 = vld [vmem:[%s2244 + $0x40] sm:$0xf]
      %v2455 = vld [vmem:[%s2244 + $0x44] sm:$0x1]
      %v2456 = vld [vmem:[%s2244 + $0x48] sm:$0xf]
      %v2457 = vld [vmem:[%s2244 + $0x4c] sm:$0xf]
      %v2458 = vld [vmem:[%s2244 + $0x50] sm:$0x1]
      %v2459 = vld [vmem:[%s2244 + $0x54] sm:$0xf]
      %v2460 = vld [vmem:[%s2244 + $0x58] sm:$0xf]
      %v2461 = vld [vmem:[%s2244 + $0x5c] sm:$0x1]
      %v2462 = vld [vmem:[%s2244 + $0x60] sm:$0xf]
      %v2463 = vld [vmem:[%s2244 + $0x64] sm:$0xf]
      %v2464 = vld [vmem:[%s2244 + $0x68] sm:$0x1]
      %v2465 = vld [vmem:[%s2244 + $0x6c] sm:$0xf]
      %v2466 = vld [vmem:[%s2244 + $0x70] sm:$0xf]
      %v2467 = vld [vmem:[%s2244 + $0x74] sm:$0x1]
      %v2468 = vld [vmem:[%s2244 + $0x78] sm:$0xf]
      %v2469 = vld [vmem:[%s2244 + $0x7c] sm:$0xf]
      %v2470 = vld [vmem:[%s2244 + $0x80] sm:$0x1]
      %v2471 = vld [vmem:[%s2244 + $0x84] sm:$0xf]
      %v2472 = vld [vmem:[%s2244 + $0x88] sm:$0xf]
      %v2473 = vld [vmem:[%s2244 + $0x8c] sm:$0x1]
      %v2474 = vld [vmem:[%s2244 + $0x90] sm:$0xf]
      %v2475 = vld [vmem:[%s2244 + $0x94] sm:$0xf]
      %v2476 = vld [vmem:[%s2244 + $0x98] sm:$0x1]
      %v2477 = vld [vmem:[%s2244 + $0x9c] sm:$0xf]
      %v2478 = vld [vmem:[%s2244 + $0xa0] sm:$0xf]
      %v2479 = vld [vmem:[%s2244 + $0xa4] sm:$0x1]
      %v2480 = vld [vmem:[%s2244 + $0xa8] sm:$0xf]
      %v2481 = vld [vmem:[%s2244 + $0xac] sm:$0xf]
      %v2482 = vld [vmem:[%s2244 + $0xb0] sm:$0x1]
      %v2483 = vld [vmem:[%s2244 + $0xb4] sm:$0xf]
      %v2484 = vld [vmem:[%s2244 + $0xb8] sm:$0xf]
      %v2485 = vld [vmem:[%s2244 + $0xbc] sm:$0x1]
      %v2487 = vshrl.u32 %v2438, 16
      %v2489 = vrot.slane %v2487, 4
      %v2490 = vshll.u32 %v2438, 16
      %v2492 = vrot.slane %v2490, 5
      %v2493 = vor.u32 %v2489, %v2492
      %v2494 = vrot.slane %v2493, 4
      %v2496 = vshll.u32 %v2439, 16
      %v2498 = vrot.slane %v2496, 5
      %v2499 = vsel %vm222, %v2494, %v2498
      %v2500 = vshrl.u32 %v2439, 16
      %v2502 = vrot.slane %v2500, 4
      %v2503 = vor.u32 %v2502, %v2498
      %v2504 = vrot.slane %v2503, 4
      %v2506 = vshll.u32 %v2440, 16
      %v2508 = vrot.slane %v2506, 5
      %v2509 = vsel %vm222, %v2504, %v2508
      %v2511 = vshrl.u32 %v2441, 16
      %v2513 = vrot.slane %v2511, 4
      %v2514 = vshll.u32 %v2441, 16
      %v2516 = vrot.slane %v2514, 5
      %v2517 = vor.u32 %v2513, %v2516
      %v2518 = vrot.slane %v2517, 4
      %v2520 = vshll.u32 %v2442, 16
      %v2522 = vrot.slane %v2520, 5
      %v2523 = vsel %vm222, %v2518, %v2522
      %v2524 = vshrl.u32 %v2442, 16
      %v2526 = vrot.slane %v2524, 4
      %v2527 = vor.u32 %v2526, %v2522
      %v2528 = vrot.slane %v2527, 4
      %v2530 = vshll.u32 %v2443, 16
      %v2532 = vrot.slane %v2530, 5
      %v2533 = vsel %vm222, %v2528, %v2532
      %v2535 = vshrl.u32 %v2444, 16
      %v2537 = vrot.slane %v2535, 4
      %v2538 = vshll.u32 %v2444, 16
      %v2540 = vrot.slane %v2538, 5
      %v2541 = vor.u32 %v2537, %v2540
      %v2542 = vrot.slane %v2541, 4
      %v2544 = vshll.u32 %v2445, 16
      %v2546 = vrot.slane %v2544, 5
      %v2547 = vsel %vm222, %v2542, %v2546
      %v2548 = vshrl.u32 %v2445, 16
      %v2550 = vrot.slane %v2548, 4
      %v2551 = vor.u32 %v2550, %v2546
      %v2552 = vrot.slane %v2551, 4
      %v2554 = vshll.u32 %v2446, 16
      %v2556 = vrot.slane %v2554, 5
      %v2557 = vsel %vm222, %v2552, %v2556
      %v2559 = vshrl.u32 %v2447, 16
      %v2561 = vrot.slane %v2559, 4
      %v2562 = vshll.u32 %v2447, 16
      %v2564 = vrot.slane %v2562, 5
      %v2565 = vor.u32 %v2561, %v2564
      %v2566 = vrot.slane %v2565, 4
      %v2568 = vshll.u32 %v2448, 16
      %v2570 = vrot.slane %v2568, 5
      %v2571 = vsel %vm222, %v2566, %v2570
      %v2572 = vshrl.u32 %v2448, 16
      %v2574 = vrot.slane %v2572, 4
      %v2575 = vor.u32 %v2574, %v2570
      %v2576 = vrot.slane %v2575, 4
      %v2578 = vshll.u32 %v2449, 16
      %v2580 = vrot.slane %v2578, 5
      %v2581 = vsel %vm222, %v2576, %v2580
      %v2583 = vshrl.u32 %v2450, 16
      %v2585 = vrot.slane %v2583, 4
      %v2586 = vshll.u32 %v2450, 16
      %v2588 = vrot.slane %v2586, 5
      %v2589 = vor.u32 %v2585, %v2588
      %v2590 = vrot.slane %v2589, 4
      %v2592 = vshll.u32 %v2451, 16
      %v2594 = vrot.slane %v2592, 5
      %v2595 = vsel %vm222, %v2590, %v2594
      %v2596 = vshrl.u32 %v2451, 16
      %v2598 = vrot.slane %v2596, 4
      %v2599 = vor.u32 %v2598, %v2594
      %v2600 = vrot.slane %v2599, 4
      %v2602 = vshll.u32 %v2452, 16
      %v2604 = vrot.slane %v2602, 5
      %v2605 = vsel %vm222, %v2600, %v2604
      %v2607 = vshrl.u32 %v2453, 16
      %v2609 = vrot.slane %v2607, 4
      %v2610 = vshll.u32 %v2453, 16
      %v2612 = vrot.slane %v2610, 5
      %v2613 = vor.u32 %v2609, %v2612
      %v2614 = vrot.slane %v2613, 4
      %v2616 = vshll.u32 %v2454, 16
      %v2618 = vrot.slane %v2616, 5
      %v2619 = vsel %vm222, %v2614, %v2618
      %v2620 = vshrl.u32 %v2454, 16
      %v2622 = vrot.slane %v2620, 4
      %v2623 = vor.u32 %v2622, %v2618
      %v2624 = vrot.slane %v2623, 4
      %v2626 = vshll.u32 %v2455, 16
      %v2628 = vrot.slane %v2626, 5
      %v2629 = vsel %vm222, %v2624, %v2628
      %v2631 = vshrl.u32 %v2456, 16
      %v2633 = vrot.slane %v2631, 4
      %v2634 = vshll.u32 %v2456, 16
      %v2636 = vrot.slane %v2634, 5
      %v2637 = vor.u32 %v2633, %v2636
      %v2638 = vrot.slane %v2637, 4
      %v2640 = vshll.u32 %v2457, 16
      %v2642 = vrot.slane %v2640, 5
      %v2643 = vsel %vm222, %v2638, %v2642
      %v2644 = vshrl.u32 %v2457, 16
      %v2646 = vrot.slane %v2644, 4
      %v2647 = vor.u32 %v2646, %v2642
      %v2648 = vrot.slane %v2647, 4
      %v2650 = vshll.u32 %v2458, 16
      %v2652 = vrot.slane %v2650, 5
      %v2653 = vsel %vm222, %v2648, %v2652
      %v2655 = vshrl.u32 %v2459, 16
      %v2657 = vrot.slane %v2655, 4
      %v2658 = vshll.u32 %v2459, 16
      %v2660 = vrot.slane %v2658, 5
      %v2661 = vor.u32 %v2657, %v2660
      %v2662 = vrot.slane %v2661, 4
      %v2664 = vshll.u32 %v2460, 16
      %v2666 = vrot.slane %v2664, 5
      %v2667 = vsel %vm222, %v2662, %v2666
      %v2668 = vshrl.u32 %v2460, 16
      %v2670 = vrot.slane %v2668, 4
      %v2671 = vor.u32 %v2670, %v2666
      %v2672 = vrot.slane %v2671, 4
      %v2674 = vshll.u32 %v2461, 16
      %v2676 = vrot.slane %v2674, 5
      %v2677 = vsel %vm222, %v2672, %v2676
      %v2679 = vshrl.u32 %v2462, 16
      %v2681 = vrot.slane %v2679, 4
      %v2682 = vshll.u32 %v2462, 16
      %v2684 = vrot.slane %v2682, 5
      %v2685 = vor.u32 %v2681, %v2684
      %v2686 = vrot.slane %v2685, 4
      %v2688 = vshll.u32 %v2463, 16
      %v2690 = vrot.slane %v2688, 5
      %v2691 = vsel %vm222, %v2686, %v2690
      %v2692 = vshrl.u32 %v2463, 16
      %v2694 = vrot.slane %v2692, 4
      %v2695 = vor.u32 %v2694, %v2690
      %v2696 = vrot.slane %v2695, 4
      %v2698 = vshll.u32 %v2464, 16
      %v2700 = vrot.slane %v2698, 5
      %v2701 = vsel %vm222, %v2696, %v2700
      %v2703 = vshrl.u32 %v2465, 16
      %v2705 = vrot.slane %v2703, 4
      %v2706 = vshll.u32 %v2465, 16
      %v2708 = vrot.slane %v2706, 5
      %v2709 = vor.u32 %v2705, %v2708
      %v2710 = vrot.slane %v2709, 4
      %v2712 = vshll.u32 %v2466, 16
      %v2714 = vrot.slane %v2712, 5
      %v2715 = vsel %vm222, %v2710, %v2714
      %v2716 = vshrl.u32 %v2466, 16
      %v2718 = vrot.slane %v2716, 4
      %v2719 = vor.u32 %v2718, %v2714
      %v2720 = vrot.slane %v2719, 4
      %v2722 = vshll.u32 %v2467, 16
      %v2724 = vrot.slane %v2722, 5
      %v2725 = vsel %vm222, %v2720, %v2724
      %v2727 = vshrl.u32 %v2468, 16
      %v2729 = vrot.slane %v2727, 4
      %v2730 = vshll.u32 %v2468, 16
      %v2732 = vrot.slane %v2730, 5
      %v2733 = vor.u32 %v2729, %v2732
      %v2734 = vrot.slane %v2733, 4
      %v2736 = vshll.u32 %v2469, 16
      %v2738 = vrot.slane %v2736, 5
      %v2739 = vsel %vm222, %v2734, %v2738
      %v2740 = vshrl.u32 %v2469, 16
      %v2742 = vrot.slane %v2740, 4
      %v2743 = vor.u32 %v2742, %v2738
      %v2744 = vrot.slane %v2743, 4
      %v2746 = vshll.u32 %v2470, 16
      %v2748 = vrot.slane %v2746, 5
      %v2749 = vsel %vm222, %v2744, %v2748
      %v2751 = vshrl.u32 %v2471, 16
      %v2753 = vrot.slane %v2751, 4
      %v2754 = vshll.u32 %v2471, 16
      %v2756 = vrot.slane %v2754, 5
      %v2757 = vor.u32 %v2753, %v2756
      %v2758 = vrot.slane %v2757, 4
      %v2760 = vshll.u32 %v2472, 16
      %v2762 = vrot.slane %v2760, 5
      %v2763 = vsel %vm222, %v2758, %v2762
      %v2764 = vshrl.u32 %v2472, 16
      %v2766 = vrot.slane %v2764, 4
      %v2767 = vor.u32 %v2766, %v2762
      %v2768 = vrot.slane %v2767, 4
      %v2770 = vshll.u32 %v2473, 16
      %v2772 = vrot.slane %v2770, 5
      %v2773 = vsel %vm222, %v2768, %v2772
      %v2775 = vshrl.u32 %v2474, 16
      %v2777 = vrot.slane %v2775, 4
      %v2778 = vshll.u32 %v2474, 16
      %v2780 = vrot.slane %v2778, 5
      %v2781 = vor.u32 %v2777, %v2780
      %v2782 = vrot.slane %v2781, 4
      %v2784 = vshll.u32 %v2475, 16
      %v2786 = vrot.slane %v2784, 5
      %v2787 = vsel %vm222, %v2782, %v2786
      %v2788 = vshrl.u32 %v2475, 16
      %v2790 = vrot.slane %v2788, 4
      %v2791 = vor.u32 %v2790, %v2786
      %v2792 = vrot.slane %v2791, 4
      %v2794 = vshll.u32 %v2476, 16
      %v2796 = vrot.slane %v2794, 5
      %v2797 = vsel %vm222, %v2792, %v2796
      %v2799 = vshrl.u32 %v2477, 16
      %v2801 = vrot.slane %v2799, 4
      %v2802 = vshll.u32 %v2477, 16
      %v2804 = vrot.slane %v2802, 5
      %v2805 = vor.u32 %v2801, %v2804
      %v2806 = vrot.slane %v2805, 4
      %v2808 = vshll.u32 %v2478, 16
      %v2810 = vrot.slane %v2808, 5
      %v2811 = vsel %vm222, %v2806, %v2810
      %v2812 = vshrl.u32 %v2478, 16
      %v2814 = vrot.slane %v2812, 4
      %v2815 = vor.u32 %v2814, %v2810
      %v2816 = vrot.slane %v2815, 4
      %v2818 = vshll.u32 %v2479, 16
      %v2820 = vrot.slane %v2818, 5
      %v2821 = vsel %vm222, %v2816, %v2820
      %v2823 = vshrl.u32 %v2480, 16
      %v2825 = vrot.slane %v2823, 4
      %v2826 = vshll.u32 %v2480, 16
      %v2828 = vrot.slane %v2826, 5
      %v2829 = vor.u32 %v2825, %v2828
      %v2830 = vrot.slane %v2829, 4
      %v2832 = vshll.u32 %v2481, 16
      %v2834 = vrot.slane %v2832, 5
      %v2835 = vsel %vm222, %v2830, %v2834
      %v2836 = vshrl.u32 %v2481, 16
      %v2838 = vrot.slane %v2836, 4
      %v2839 = vor.u32 %v2838, %v2834
      %v2840 = vrot.slane %v2839, 4
      %v2842 = vshll.u32 %v2482, 16
      %v2844 = vrot.slane %v2842, 5
      %v2845 = vsel %vm222, %v2840, %v2844
      %v2847 = vshrl.u32 %v2483, 16
      %v2849 = vrot.slane %v2847, 4
      %v2850 = vshll.u32 %v2483, 16
      %v2852 = vrot.slane %v2850, 5
      %v2853 = vor.u32 %v2849, %v2852
      %v2854 = vrot.slane %v2853, 4
      %v2856 = vshll.u32 %v2484, 16
      %v2858 = vrot.slane %v2856, 5
      %v2859 = vsel %vm222, %v2854, %v2858
      %v2860 = vshrl.u32 %v2484, 16
      %v2862 = vrot.slane %v2860, 4
      %v2863 = vor.u32 %v2862, %v2858
      %v2864 = vrot.slane %v2863, 4
      %v2866 = vshll.u32 %v2485, 16
      %v2868 = vrot.slane %v2866, 5
      %v2869 = vsel %vm222, %v2864, %v2868
      %s2870 = scalar_lea.vmem %s1, 28
      %v2871 = vld [vmem:[%s2870] sm:$0xf]
      %v2872 = vunpack.c.l.b16 %v2499
      %v2873 = vunpack.c.l.b16 %v2509
      %v2874 = vunpack.c.l.b16 %v2523
      %v2875 = vunpack.c.l.b16 %v2533
      %v2876 = vunpack.c.l.b16 %v2547
      %v2877 = vunpack.c.l.b16 %v2557
      %v2878 = vunpack.c.l.b16 %v2571
      %v2879 = vunpack.c.l.b16 %v2581
      %v2880 = vunpack.c.l.b16 %v2595
      %v2881 = vunpack.c.l.b16 %v2605
      %v2882 = vunpack.c.l.b16 %v2619
      %v2883 = vunpack.c.l.b16 %v2629
      %v2884 = vunpack.c.l.b16 %v2643
      %v2885 = vunpack.c.l.b16 %v2653
      %v2886 = vunpack.c.l.b16 %v2667
      %v2887 = vunpack.c.l.b16 %v2677
      %v2888 = vunpack.c.l.b16 %v2691
      %v2889 = vunpack.c.l.b16 %v2701
      %v2890 = vunpack.c.l.b16 %v2715
      %v2891 = vunpack.c.l.b16 %v2725
      %v2892 = vunpack.c.l.b16 %v2739
      %v2893 = vunpack.c.l.b16 %v2749
      %v2894 = vunpack.c.l.b16 %v2763
      %v2895 = vunpack.c.l.b16 %v2773
      %v2896 = vunpack.c.l.b16 %v2787
      %v2897 = vunpack.c.l.b16 %v2797
      %v2898 = vunpack.c.l.b16 %v2811
      %v2899 = vunpack.c.l.b16 %v2821
      %v2900 = vunpack.c.l.b16 %v2835
      %v2901 = vunpack.c.l.b16 %v2845
      %v2902 = vunpack.c.l.b16 %v2859
      %v2903 = vunpack.c.l.b16 %v2869
      %v2904 = vpack.c.b16 %v2873, %v2872
      %v2905 = vpack.c.b16 %v2875, %v2874
      %v2906 = vpack.c.b16 %v2877, %v2876
      %v2907 = vpack.c.b16 %v2879, %v2878
      %v2908 = vpack.c.b16 %v2881, %v2880
      %v2909 = vpack.c.b16 %v2883, %v2882
      %v2910 = vpack.c.b16 %v2885, %v2884
      %v2911 = vpack.c.b16 %v2887, %v2886
      %v2912 = vpack.c.b16 %v2889, %v2888
      %v2913 = vpack.c.b16 %v2891, %v2890
      %v2914 = vpack.c.b16 %v2893, %v2892
      %v2915 = vpack.c.b16 %v2895, %v2894
      %v2916 = vpack.c.b16 %v2897, %v2896
      %v2917 = vpack.c.b16 %v2899, %v2898
      %v2918 = vpack.c.b16 %v2901, %v2900
      %v2919 = vpack.c.b16 %v2903, %v2902
      %v2921 = vsel %vm657, %v2871, 0
      %v2924 = vsel %vm657, %v2904, 0
      %v2927 = vsel %vm657, %v2905, 0
      %v2930 = vsel %vm657, %v2906, 0
      %v2933 = vsel %vm657, %v2907, 0
      %v2936 = vsel %vm657, %v2908, 0
      %v2939 = vsel %vm657, %v2909, 0
      %v2942 = vsel %vm657, %v2910, 0
      %v2945 = vsel %vm657, %v2911, 0
      %v2948 = vsel %vm657, %v2912, 0
      %v2951 = vsel %vm657, %v2913, 0
      %v2954 = vsel %vm657, %v2914, 0
      %v2957 = vsel %vm657, %v2915, 0
      %v2960 = vsel %vm657, %v2916, 0
      %v2963 = vsel %vm657, %v2917, 0
      %v2966 = vsel %vm657, %v2918, 0
      %v2969 = vsel %vm657, %v2919, 0
      %2971 = vmatpush.bf16.xpose.msra.mxu0 %v2945
      %2972 = vmatpush.bf16.xpose.msra.mxu0 %v2942
      %2973 = vmatpush.bf16.xpose.msra.mxu0 %v2939
      %2974 = vmatpush.bf16.xpose.msra.mxu0 %v2936
      %2975 = vmatpush.bf16.xpose.msra.mxu0 %v2933
      %2976 = vmatpush.bf16.xpose.msra.mxu0 %v2930
      %2977 = vmatpush.bf16.xpose.msra.mxu0 %v2927
      %2978 = vmatpush.bf16.xpose.msra.mxu0 %v2924
      %2979 = vmatmul.bf16.gmra.mxu0 %v2921
      %v2980 = vpop.f32.mrf.mxu0
      %v2981 = vadd.f32 0.0, %v2980
      %v2982 = vpop.f32.mrf.mxu0
      %2983 = vdwg.mxu0
      %2984 = vmatpush.bf16.xpose.msra.mxu0 %v2969
      %2985 = vmatpush.bf16.xpose.msra.mxu0 %v2966
      %2986 = vmatpush.bf16.xpose.msra.mxu0 %v2963
      %2987 = vmatpush.bf16.xpose.msra.mxu0 %v2960
      %2988 = vmatpush.bf16.xpose.msra.mxu0 %v2957
      %2989 = vmatpush.bf16.xpose.msra.mxu0 %v2954
      %2990 = vmatpush.bf16.xpose.msra.mxu0 %v2951
      %2991 = vmatpush.bf16.xpose.msra.mxu0 %v2948
      %2992 = vmatmul.bf16.gmra.mxu0 %v2921
      %v2993 = vpop.f32.mrf.mxu0
      %v2994 = vadd.f32 0.0, %v2993
      %v2995 = vpop.f32.mrf.mxu0
      %2996 = vdwg.mxu0
      %v2997 = vadd.f32 %v2436, %v2981
      %v2998 = vadd.f32 %v2437, %v2994
      %v2999 = vld [vmem:[%s2244] sm:$0xe]
      %v3000 = vld [vmem:[%s2244 + $0xc] sm:$0xe]
      %v3001 = vld [vmem:[%s2244 + $0x18] sm:$0xe]
      %v3002 = vld [vmem:[%s2244 + $0x24] sm:$0xe]
      %v3003 = vld [vmem:[%s2244 + $0x30] sm:$0xe]
      %v3004 = vld [vmem:[%s2244 + $0x3c] sm:$0xe]
      %v3005 = vld [vmem:[%s2244 + $0x48] sm:$0xe]
      %v3006 = vld [vmem:[%s2244 + $0x54] sm:$0xe]
      %v3007 = vld [vmem:[%s2244 + $0x60] sm:$0xe]
      %v3008 = vld [vmem:[%s2244 + $0x6c] sm:$0xe]
      %v3009 = vld [vmem:[%s2244 + $0x78] sm:$0xe]
      %v3010 = vld [vmem:[%s2244 + $0x84] sm:$0xe]
      %v3011 = vld [vmem:[%s2244 + $0x90] sm:$0xe]
      %v3012 = vld [vmem:[%s2244 + $0x9c] sm:$0xe]
      %v3013 = vld [vmem:[%s2244 + $0xa8] sm:$0xe]
      %v3014 = vld [vmem:[%s2244 + $0xb4] sm:$0xe]
      %v3063 = vrot.slane %v2999, 5
      %v3064 = vrot.slane %v3063, 4
      %v3065 = vrot.slane %v2439, 5
      %v3066 = vsel %vm942, %v3064, %v3065
      %v3067 = vrot.slane %v3065, 4
      %v3068 = vrot.slane %v2440, 5
      %v3069 = vsel %vm942, %v3067, %v3068
      %v3070 = vrot.slane %v3000, 5
      %v3071 = vrot.slane %v3070, 4
      %v3072 = vrot.slane %v2442, 5
      %v3073 = vsel %vm942, %v3071, %v3072
      %v3074 = vrot.slane %v3072, 4
      %v3075 = vrot.slane %v2443, 5
      %v3076 = vsel %vm942, %v3074, %v3075
      %v3077 = vrot.slane %v3001, 5
      %v3078 = vrot.slane %v3077, 4
      %v3079 = vrot.slane %v2445, 5
      %v3080 = vsel %vm942, %v3078, %v3079
      %v3081 = vrot.slane %v3079, 4
      %v3082 = vrot.slane %v2446, 5
      %v3083 = vsel %vm942, %v3081, %v3082
      %v3084 = vrot.slane %v3002, 5
      %v3085 = vrot.slane %v3084, 4
      %v3086 = vrot.slane %v2448, 5
      %v3087 = vsel %vm942, %v3085, %v3086
      %v3088 = vrot.slane %v3086, 4
      %v3089 = vrot.slane %v2449, 5
      %v3090 = vsel %vm942, %v3088, %v3089
      %v3091 = vrot.slane %v3003, 5
      %v3092 = vrot.slane %v3091, 4
      %v3093 = vrot.slane %v2451, 5
      %v3094 = vsel %vm942, %v3092, %v3093
      %v3095 = vrot.slane %v3093, 4
      %v3096 = vrot.slane %v2452, 5
      %v3097 = vsel %vm942, %v3095, %v3096
      %v3098 = vrot.slane %v3004, 5
      %v3099 = vrot.slane %v3098, 4
      %v3100 = vrot.slane %v2454, 5
      %v3101 = vsel %vm942, %v3099, %v3100
      %v3102 = vrot.slane %v3100, 4
      %v3103 = vrot.slane %v2455, 5
      %v3104 = vsel %vm942, %v3102, %v3103
      %v3105 = vrot.slane %v3005, 5
      %v3106 = vrot.slane %v3105, 4
      %v3107 = vrot.slane %v2457, 5
      %v3108 = vsel %vm942, %v3106, %v3107
      %v3109 = vrot.slane %v3107, 4
      %v3110 = vrot.slane %v2458, 5
      %v3111 = vsel %vm942, %v3109, %v3110
      %v3112 = vrot.slane %v3006, 5
      %v3113 = vrot.slane %v3112, 4
      %v3114 = vrot.slane %v2460, 5
      %v3115 = vsel %vm942, %v3113, %v3114
      %v3116 = vrot.slane %v3114, 4
      %v3117 = vrot.slane %v2461, 5
      %v3118 = vsel %vm942, %v3116, %v3117
      %v3119 = vrot.slane %v3007, 5
      %v3120 = vrot.slane %v3119, 4
      %v3121 = vrot.slane %v2463, 5
      %v3122 = vsel %vm942, %v3120, %v3121
      %v3123 = vrot.slane %v3121, 4
      %v3124 = vrot.slane %v2464, 5
      %v3125 = vsel %vm942, %v3123, %v3124
      %v3126 = vrot.slane %v3008, 5
      %v3127 = vrot.slane %v3126, 4
      %v3128 = vrot.slane %v2466, 5
      %v3129 = vsel %vm942, %v3127, %v3128
      %v3130 = vrot.slane %v3128, 4
      %v3131 = vrot.slane %v2467, 5
      %v3132 = vsel %vm942, %v3130, %v3131
      %v3133 = vrot.slane %v3009, 5
      %v3134 = vrot.slane %v3133, 4
      %v3135 = vrot.slane %v2469, 5
      %v3136 = vsel %vm942, %v3134, %v3135
      %v3137 = vrot.slane %v3135, 4
      %v3138 = vrot.slane %v2470, 5
      %v3139 = vsel %vm942, %v3137, %v3138
      %v3140 = vrot.slane %v3010, 5
      %v3141 = vrot.slane %v3140, 4
      %v3142 = vrot.slane %v2472, 5
      %v3143 = vsel %vm942, %v3141, %v3142
      %v3144 = vrot.slane %v3142, 4
      %v3145 = vrot.slane %v2473, 5
      %v3146 = vsel %vm942, %v3144, %v3145
      %v3147 = vrot.slane %v3011, 5
      %v3148 = vrot.slane %v3147, 4
      %v3149 = vrot.slane %v2475, 5
      %v3150 = vsel %vm942, %v3148, %v3149
      %v3151 = vrot.slane %v3149, 4
      %v3152 = vrot.slane %v2476, 5
      %v3153 = vsel %vm942, %v3151, %v3152
      %v3154 = vrot.slane %v3012, 5
      %v3155 = vrot.slane %v3154, 4
      %v3156 = vrot.slane %v2478, 5
      %v3157 = vsel %vm942, %v3155, %v3156
      %v3158 = vrot.slane %v3156, 4
      %v3159 = vrot.slane %v2479, 5
      %v3160 = vsel %vm942, %v3158, %v3159
      %v3161 = vrot.slane %v3013, 5
      %v3162 = vrot.slane %v3161, 4
      %v3163 = vrot.slane %v2481, 5
      %v3164 = vsel %vm942, %v3162, %v3163
      %v3165 = vrot.slane %v3163, 4
      %v3166 = vrot.slane %v2482, 5
      %v3167 = vsel %vm942, %v3165, %v3166
      %v3168 = vrot.slane %v3014, 5
      %v3169 = vrot.slane %v3168, 4
      %v3170 = vrot.slane %v2484, 5
      %v3171 = vsel %vm942, %v3169, %v3170
      %v3172 = vrot.slane %v3170, 4
      %v3173 = vrot.slane %v2485, 5
      %v3174 = vsel %vm942, %v3172, %v3173
      %s3175 = scalar_lea.vmem %s1, 32
      %v3176 = vld [vmem:[%s3175] sm:$0xf]
      %v3177 = vunpack.c.l.b16 %v3066
      %v3178 = vunpack.c.l.b16 %v3069
      %v3179 = vunpack.c.l.b16 %v3073
      %v3180 = vunpack.c.l.b16 %v3076
      %v3181 = vunpack.c.l.b16 %v3080
      %v3182 = vunpack.c.l.b16 %v3083
      %v3183 = vunpack.c.l.b16 %v3087
      %v3184 = vunpack.c.l.b16 %v3090
      %v3185 = vunpack.c.l.b16 %v3094
      %v3186 = vunpack.c.l.b16 %v3097
      %v3187 = vunpack.c.l.b16 %v3101
      %v3188 = vunpack.c.l.b16 %v3104
      %v3189 = vunpack.c.l.b16 %v3108
      %v3190 = vunpack.c.l.b16 %v3111
      %v3191 = vunpack.c.l.b16 %v3115
      %v3192 = vunpack.c.l.b16 %v3118
      %v3193 = vunpack.c.l.b16 %v3122
      %v3194 = vunpack.c.l.b16 %v3125
      %v3195 = vunpack.c.l.b16 %v3129
      %v3196 = vunpack.c.l.b16 %v3132
      %v3197 = vunpack.c.l.b16 %v3136
      %v3198 = vunpack.c.l.b16 %v3139
      %v3199 = vunpack.c.l.b16 %v3143
      %v3200 = vunpack.c.l.b16 %v3146
      %v3201 = vunpack.c.l.b16 %v3150
      %v3202 = vunpack.c.l.b16 %v3153
      %v3203 = vunpack.c.l.b16 %v3157
      %v3204 = vunpack.c.l.b16 %v3160
      %v3205 = vunpack.c.l.b16 %v3164
      %v3206 = vunpack.c.l.b16 %v3167
      %v3207 = vunpack.c.l.b16 %v3171
      %v3208 = vunpack.c.l.b16 %v3174
      %v3209 = vpack.c.b16 %v3178, %v3177
      %v3210 = vpack.c.b16 %v3180, %v3179
      %v3211 = vpack.c.b16 %v3182, %v3181
      %v3212 = vpack.c.b16 %v3184, %v3183
      %v3213 = vpack.c.b16 %v3186, %v3185
      %v3214 = vpack.c.b16 %v3188, %v3187
      %v3215 = vpack.c.b16 %v3190, %v3189
      %v3216 = vpack.c.b16 %v3192, %v3191
      %v3217 = vpack.c.b16 %v3194, %v3193
      %v3218 = vpack.c.b16 %v3196, %v3195
      %v3219 = vpack.c.b16 %v3198, %v3197
      %v3220 = vpack.c.b16 %v3200, %v3199
      %v3221 = vpack.c.b16 %v3202, %v3201
      %v3222 = vpack.c.b16 %v3204, %v3203
      %v3223 = vpack.c.b16 %v3206, %v3205
      %v3224 = vpack.c.b16 %v3208, %v3207
      %v3226 = vsel %vm657, %v3176, 0
      %v3229 = vsel %vm657, %v3209, 0
      %v3232 = vsel %vm657, %v3210, 0
      %v3235 = vsel %vm657, %v3211, 0
      %v3238 = vsel %vm657, %v3212, 0
      %v3241 = vsel %vm657, %v3213, 0
      %v3244 = vsel %vm657, %v3214, 0
      %v3247 = vsel %vm657, %v3215, 0
      %v3250 = vsel %vm657, %v3216, 0
      %v3253 = vsel %vm657, %v3217, 0
      %v3256 = vsel %vm657, %v3218, 0
      %v3259 = vsel %vm657, %v3219, 0
      %v3262 = vsel %vm657, %v3220, 0
      %v3265 = vsel %vm657, %v3221, 0
      %v3268 = vsel %vm657, %v3222, 0
      %v3271 = vsel %vm657, %v3223, 0
      %v3274 = vsel %vm657, %v3224, 0
      %3276 = vmatpush.bf16.xpose.msra.mxu0 %v3250
      %3277 = vmatpush.bf16.xpose.msra.mxu0 %v3247
      %3278 = vmatpush.bf16.xpose.msra.mxu0 %v3244
      %3279 = vmatpush.bf16.xpose.msra.mxu0 %v3241
      %3280 = vmatpush.bf16.xpose.msra.mxu0 %v3238
      %3281 = vmatpush.bf16.xpose.msra.mxu0 %v3235
      %3282 = vmatpush.bf16.xpose.msra.mxu0 %v3232
      %3283 = vmatpush.bf16.xpose.msra.mxu0 %v3229
      %3284 = vmatmul.bf16.gmra.mxu0 %v3226
      %v3285 = vpop.f32.mrf.mxu0
      %v3286 = vadd.f32 0.0, %v3285
      %v3287 = vpop.f32.mrf.mxu0
      %3288 = vdwg.mxu0
      %3289 = vmatpush.bf16.xpose.msra.mxu0 %v3274
      %3290 = vmatpush.bf16.xpose.msra.mxu0 %v3271
      %3291 = vmatpush.bf16.xpose.msra.mxu0 %v3268
      %3292 = vmatpush.bf16.xpose.msra.mxu0 %v3265
      %3293 = vmatpush.bf16.xpose.msra.mxu0 %v3262
      %3294 = vmatpush.bf16.xpose.msra.mxu0 %v3259
      %3295 = vmatpush.bf16.xpose.msra.mxu0 %v3256
      %3296 = vmatpush.bf16.xpose.msra.mxu0 %v3253
      %3297 = vmatmul.bf16.gmra.mxu0 %v3226
      %v3298 = vpop.f32.mrf.mxu0
      %v3299 = vadd.f32 0.0, %v3298
      %v3300 = vpop.f32.mrf.mxu0
      %3301 = vdwg.mxu0
      %v3302 = vadd.f32 %v2997, %v3286
      %v3303 = vadd.f32 %v2998, %v3299
      %v3304 = vld [vmem:[%s2] sm:$0xff]
      %3306 = vset.pattern.permute.xlu0 0
      %3307 = vperm.xlu0 %3306, %v3304
      %v3308 = vpop.permute.xlu0 %3307
      %v3310 = vadd.f32 %v3302, %v3308
      %v3311 = vadd.f32 %v3303, %v3308
      %v3312 = vmax.f32 %v3310, 0.0
      %v3313 = vmax.f32 %v3311, 0.0
      %3314 = vst [vmem:[%s170] sm:$0xff] %v3312
      %3315 = vst [vmem:[%s170 + $0x8] sm:$0xff] %v3313
      %p3316 = scmp.lt.s32.totalorder %s14, 1
      %s3317 = scalar_select %p3316, %s14, 1
      %s3318 = smul.addr %s3317, 2
      %s3319 = smul.addr %s3318, 8
      %s3320 = scalar_lea.vmem %s3, %s3319
      // Predicated region
      $region33: #{conv2d_block_forward.1} parent=31 // pred_check
        %p3321 = pneg %p100
      $region34: #{conv2d_block_forward.1} parent=31 // pred_check_branch
        %3323 = sbr.rel (%p3321) target = $region36
      $region35: #{conv2d_block_forward.1} parent=31 // pred_region
        _
      $region36: #{conv2d_block_forward.1} parent=31 // pred_fallthru
        _
    $region32: #{conv2d_block_forward.1} parent=5 // pred_fallthru
      _
    %p3324 = scmp.le.s32.totalorder 2, %s9
    // Predicated region
    $region37: #{conv2d_block_forward.1} parent=5 // pred_check
      %p3325 = pneg %p3324
    $region38: #{conv2d_block_forward.1} parent=5 // pred_check_branch
      %3327 = sbr.rel (%p3325) target = $region40
    $region39: #{conv2d_block_forward.1} parent=5 // pred_region
      %s3328 = ssub.s32 %s9, 2
      // Predicated region
      $region41: #{conv2d_block_forward.1} parent=39 // pred_check
        %p3329 = pneg %p106
      $region42: #{conv2d_block_forward.1} parent=39 // pred_check_branch
        %3331 = sbr.rel (%p3329) target = $region44
      $region43: #{conv2d_block_forward.1} parent=39 // pred_region
        %p3332 = scmp.lt.s32.totalorder %s15, 1
        %s3333 = scalar_select %p3332, %s15, 1
        %s3334 = smul.addr %s3333, 2
        %s3335 = smul.addr %s3334, 8
        %s3336 = scalar_lea.vmem %s3, %s3335
      $region44: #{conv2d_block_forward.1} parent=39 // pred_fallthru
        _
    $region40: #{conv2d_block_forward.1} parent=5 // pred_fallthru
      _
  $region6: #{conv2d_block_forward.1} parent=0 // loop_footer
    %s13 = sadd.s32 1, %s9
  $region7: #{conv2d_block_forward.1} parent=0 // loop_footer_branch
    %8 = sbr.rel target = $region3
  $region8: #{conv2d_block_forward.1} parent=0 // loop_exit
    _

</llo_original>
